<compile_context>
chip_gen: v7x
topology: tpu7x:2x2x1
jax: 0.10.0
libtpu: 0.0.40
codegen_flags: <defaults>
</compile_context>

<pallas_src>
import functools
import math

import jax
import jax.numpy as jnp
from jax.experimental import pallas as pl
from jax.experimental.pallas import tpu as pltpu


def _round_up(x, m):
    return ((x + m - 1) // m) * m


def _input_embedding_kernel(*refs, vocab_tile, scale, dropout_p, use_dropout):
    """One (tpb, D) output tile, accumulated over vocab tiles.

    refs (no dropout):  tok_ref, emb_ref, out_ref, acc_ref
    refs (dropout):     tok_ref, emb_ref, u_ref, out_ref, acc_ref
    """
    if use_dropout:
        tok_ref, emb_ref, u_ref, out_ref, acc_ref = refs
    else:
        tok_ref, emb_ref, out_ref, acc_ref = refs
        u_ref = None

    v = pl.program_id(1)

    @pl.when(v == 0)
    def _init():
        acc_ref[...] = jnp.zeros_like(acc_ref)

    tok = tok_ref[...]                           # (tpb, 1) int32 token ids
    tpb = tok.shape[0]

    # One-hot over this vocab tile; the matmul on the MXU performs the gather.
    vocab_ids = v * vocab_tile + jax.lax.broadcasted_iota(
        jnp.int32, (tpb, vocab_tile), 1)
    onehot = jnp.where(tok == vocab_ids, 1.0, 0.0).astype(jnp.float32)
    acc_ref[...] += jnp.dot(onehot, emb_ref[...],
                            preferred_element_type=jnp.float32,
                            precision=jax.lax.Precision.HIGHEST)

    # Final vocab step: fused scale (+ dropout select) and a single dense store.
    @pl.when(v == pl.num_programs(1) - 1)
    def _finalize():
        result = acc_ref[...] * scale            # scale = sqrt(D)[/(1-p)]
        if use_dropout:
            keep = u_ref[...] >= dropout_p       # keep with prob 1-p
            result = jnp.where(keep, result, 0.0)
        out_ref[...] = result


def input_embedding(tokens, emb_table, *, dropout_p=0.1, training=False,
                    rng=None, tokens_per_block=256, vocab_tile=512):
    """Pallas implementation of InputEmbedding.forward.

    tokens:    (B, S) integer token ids
    emb_table: (V, D) float32 embedding weight (nn.Embedding.weight)
    returns:   (B, S, D) float32
    """
    B, S = tokens.shape
    V, D = emb_table.shape
    n_tok = B * S

    # Token tiling (lane-dense output tiles, padded to a multiple of the tile).
    tpb = max(8, _round_up(int(tokens_per_block), 8))
    n_pad = _round_up(n_tok, tpb)
    flat_tok = tokens.reshape(-1).astype(jnp.int32)
    flat_tok = jnp.pad(flat_tok, (0, n_pad - n_tok)).reshape(n_pad, 1)

    # Vocab tiling (table streamed in tiles; never fully VMEM-resident).
    tv = min(_round_up(V, 8), max(8, _round_up(int(vocab_tile), 8)))
    v_pad = _round_up(V, tv)
    table = emb_table.astype(jnp.float32)
    if v_pad != V:
        table = jnp.pad(table, ((0, v_pad - V), (0, 0)))

    use_dropout = bool(training) and float(dropout_p) > 0.0
    scale = math.sqrt(D)
    if use_dropout:
        scale = scale / (1.0 - float(dropout_p))   # fold dropout rescale in

    kernel = functools.partial(
        _input_embedding_kernel,
        vocab_tile=tv,
        scale=scale,
        dropout_p=float(dropout_p),
        use_dropout=use_dropout,
    )

    in_specs = [
        pl.BlockSpec((tpb, 1), lambda i, v: (i, 0)),   # token ids
        pl.BlockSpec((tv, D), lambda i, v: (v, 0)),    # embedding table tile
    ]
    args = [flat_tok, table]
    if use_dropout:
        if rng is None:
            rng = jax.random.PRNGKey(0)
        # TODO(synk): on real TPU hardware, pltpu.prng_seed/prng_random_bits in
        # the kernel would avoid streaming this mask from HBM, but those
        # primitives have no CPU/interpret lowering.
        uniform = jax.random.uniform(rng, (n_pad, D), dtype=jnp.float32)
        in_specs.append(pl.BlockSpec((tpb, D), lambda i, v: (i, 0)))
        args.append(uniform)

    out_flat = pl.pallas_call(
        kernel,
        out_shape=jax.ShapeDtypeStruct((n_pad, D), jnp.float32),
        grid=(n_pad // tpb, v_pad // tv),
        in_specs=in_specs,
        out_specs=pl.BlockSpec((tpb, D), lambda i, v: (i, 0)),
        scratch_shapes=[pltpu.VMEM((tpb, D), jnp.float32)],
        compiler_params=pltpu.CompilerParams(
            dimension_semantics=("parallel", "arbitrary")),
    )(*args)

    return out_flat[:n_tok].reshape(B, S, D)


if __name__ == "__main__":
    # Small, deterministic setup consistent with InputEmbedding(vocab_size, d_model).
    vocab_size = 64
    d_model = 128
    B, S = 2, 8
    dropout_p = 0.1

    key = jax.random.PRNGKey(0)
    k_emb, k_tok, k_drop = jax.random.split(key, 3)

    emb_table = jax.random.normal(k_emb, (vocab_size, d_model), dtype=jnp.float32)
    tokens = jax.random.randint(k_tok, (B, S), 0, vocab_size, dtype=jnp.int32)

    # Eval mode (dropout = identity): deterministic, check against reference.
    out = input_embedding(tokens, emb_table, dropout_p=dropout_p, training=False)
    jax.block_until_ready(out)

    ref = emb_table[tokens] * math.sqrt(d_model)
    assert out.shape == (B, S, d_model)
    assert jnp.allclose(out, ref, atol=1e-4, rtol=1e-4), "mismatch vs reference"

    # Training mode: stochastic dropout; every element must be 0 or ref/(1-p).
    out_train = input_embedding(tokens, emb_table, dropout_p=dropout_p,
                                training=True, rng=k_drop)
    jax.block_until_ready(out_train)
    kept_ref = ref / (1.0 - dropout_p)
    ok = jnp.logical_or(jnp.isclose(out_train, 0.0, atol=1e-6),
                        jnp.isclose(out_train, kept_ref, atol=1e-3, rtol=1e-3))
    assert bool(jnp.all(ok)), "dropout output not in {0, ref/(1-p)}"

    print("KERNEL_OK")
</pallas_src>

<mosaic_0001>
module attributes {stable_mosaic.version = 11 : i64} {
  func.func @_input_embedding_kernel(%arg0: i32, %arg1: i32, %arg2: memref<256x1xi32, #tpu.memory_space<vmem>>, %arg3: memref<64x128xf32, #tpu.memory_space<vmem>>, %arg4: memref<256x128xf32, #tpu.memory_space<vmem>>, %arg5: memref<256x128xf32, #tpu.memory_space<vmem>>) attributes {dimension_semantics = [#tpu.dimension_semantics<parallel>, #tpu.dimension_semantics<arbitrary>], iteration_bounds = array<i64: 1, 1>, scalar_prefetch = 0 : i64, scratch_operands = 1 : i64, tpu.core_type = #tpu.core_type<tc>, window_params = [{transform_indices = @transform_0, window_bounds = array<i64: 256, 1>}, {transform_indices = @transform_1, window_bounds = array<i64: 64, 128>}, {transform_indices = @transform_2, window_bounds = array<i64: 256, 128>}]} {
    %c0_i32 = arith.constant 0 : i32
    %0 = arith.cmpi eq, %arg1, %c0_i32 : i32
    %1 = arith.extui %0 : i1 to i32
    %c0_i32_0 = arith.constant 0 : i32
    %2 = arith.cmpi ne, %1, %c0_i32_0 : i32
    scf.if %2 {
      %cst_12 = arith.constant 0.000000e+00 : f32
      %21 = vector.broadcast %cst_12 : f32 to vector<256x128xf32>
      %c0_13 = arith.constant 0 : index
      %c0_14 = arith.constant 0 : index
      %22 = vector.load %arg5[%c0_13, %c0_14] : memref<256x128xf32, #tpu.memory_space<vmem>>, vector<256x128xf32>
      tpu.vector_store %arg5[%c0_13, %c0_14], %21 {strides = array<i32>} : memref<256x128xf32, #tpu.memory_space<vmem>>, vector<256x128xf32>,
    } else {
    }
    %c0 = arith.constant 0 : index
    %c0_1 = arith.constant 0 : index
    %3 = vector.load %arg2[%c0, %c0_1] : memref<256x1xi32, #tpu.memory_space<vmem>>, vector<256x1xi32>
    %c64_i32 = arith.constant 64 : i32
    %4 = arith.muli %arg1, %c64_i32 : i32
    %5 = tpu.iota {dimensions = array<i32: 1>} : vector<256x64xi32>
    %6 = vector.broadcast %4 : i32 to vector<256x64xi32>
    %7 = arith.addi %6, %5 : vector<256x64xi32>
    %8 = vector.broadcast %3 : vector<256x1xi32> to vector<256x64xi32>
    %9 = arith.cmpi eq, %8, %7 : vector<256x64xi32>
    %cst = arith.constant 1.000000e+00 : f32
    %cst_2 = arith.constant 0.000000e+00 : f32
    %10 = vector.broadcast %cst : f32 to vector<256x64xf32>
    %11 = vector.broadcast %cst_2 : f32 to vector<256x64xf32>
    %12 = arith.select %9, %10, %11 : vector<256x64xi1>, vector<256x64xf32>
    %c0_3 = arith.constant 0 : index
    %c0_4 = arith.constant 0 : index
    %13 = vector.load %arg5[%c0_3, %c0_4] : memref<256x128xf32, #tpu.memory_space<vmem>>, vector<256x128xf32>
    %c0_5 = arith.constant 0 : index
    %c0_6 = arith.constant 0 : index
    %14 = vector.load %arg3[%c0_5, %c0_6] : memref<64x128xf32, #tpu.memory_space<vmem>>, vector<64x128xf32>
    %cst_7 = arith.constant dense<0.000000e+00> : vector<256x128xf32>
    %15 = tpu.matmul %12, %14, %cst_7 {dimension_numbers = #tpu.dot_dimension_numbers<[1], [0], [0], [1], [0, 0, 1, 1], [], []>, precision = #tpu.contract_precision<fp32>} : vector<256x64xf32>, vector<64x128xf32>, vector<256x128xf32> -> vector<256x128xf32>
    %16 = arith.addf %13, %15 : vector<256x128xf32>
    %c0_8 = arith.constant 0 : index
    %c0_9 = arith.constant 0 : index
    %17 = vector.load %arg5[%c0_8, %c0_9] : memref<256x128xf32, #tpu.memory_space<vmem>>, vector<256x128xf32>
    tpu.vector_store %arg5[%c0_8, %c0_9], %16 {strides = array<i32>} : memref<256x128xf32, #tpu.memory_space<vmem>>, vector<256x128xf32>,
    %c0_i32_10 = arith.constant 0 : i32
    %18 = arith.cmpi eq, %arg1, %c0_i32_10 : i32
    %19 = arith.extui %18 : i1 to i32
    %c0_i32_11 = arith.constant 0 : i32
    %20 = arith.cmpi ne, %19, %c0_i32_11 : i32
    scf.if %20 {
      %c0_12 = arith.constant 0 : index
      %c0_13 = arith.constant 0 : index
      %21 = vector.load %arg5[%c0_12, %c0_13] : memref<256x128xf32, #tpu.memory_space<vmem>>, vector<256x128xf32>
      %cst_14 = arith.constant 11.3137083 : f32
      %22 = vector.broadcast %cst_14 : f32 to vector<256x128xf32>
      %23 = arith.mulf %21, %22 : vector<256x128xf32>
      %c0_15 = arith.constant 0 : index
      %c0_16 = arith.constant 0 : index
      %24 = vector.load %arg4[%c0_15, %c0_16] : memref<256x128xf32, #tpu.memory_space<vmem>>, vector<256x128xf32>
      tpu.vector_store %arg4[%c0_15, %c0_16], %23 {strides = array<i32>} : memref<256x128xf32, #tpu.memory_space<vmem>>, vector<256x128xf32>,
    } else {
    }
    return
  }
  func.func @transform_0(%arg0: i32, %arg1: i32) -> (i32, i32) {
    %c0_i32 = arith.constant 0 : i32
    %c0_i32_0 = arith.constant 0 : i32
    return %arg0, %c0_i32 : i32, i32
  }
  func.func @transform_1(%arg0: i32, %arg1: i32) -> (i32, i32) {
    %c0_i32 = arith.constant 0 : i32
    %c0_i32_0 = arith.constant 0 : i32
    return %arg1, %c0_i32 : i32, i32
  }
  func.func @transform_2(%arg0: i32, %arg1: i32) -> (i32, i32) {
    %c0_i32 = arith.constant 0 : i32
    %c0_i32_0 = arith.constant 0 : i32
    return %arg0, %c0_i32 : i32, i32
  }
}

</mosaic_0001>

<llo_original>
// kernel: tpu_custom_call.1
$region0: #{tpu_custom_call.1}
  #allocation0 [shape = 'u32[]', space=smem, size = 0x4, offset = 0x4, fixed_abs, tag = 'smem constant byte address 0x4 - core index']
  #allocation1 [shape = 'u32[144,128]{1,0:T(1,128)}', space=vmem, size = 0x12000, scoped, tag = 'internal scratch']
  #allocation2 [shape = 'f32[256,128]{1,0:T(8,128)}', space=vmem, size = 0x20000, scoped, tag = 'scratch operand']
  %s0 = inlined_call_operand.vmem [shape: s32[256,1], index: 0, kind: input, shape index: {}]
  %s1 = inlined_call_operand.vmem [shape: f32[64,128], index: 1, kind: input, shape index: {}]
  %s2 = inlined_call_operand.hbm [shape: f32[256,128], index: 2, kind: output, shape index: {}]
  %s3 = sld [smem:[#allocation0]]
  $region26: #{tpu_custom_call.1} parent=0
    _
  %s5 = ssub.s32 1, %s3
  %s6 = scalar_select 0, %s5, %s3
  $region1: #{tpu_custom_call.1} parent=0
    #allocation3 [shape = 'u8[131072]{0}', space=vmem, size = 0x20000, scoped, tag = 'output window, operand 0, single buffered']
    #allocation4 [shape = 's32[1]{0}', space=sflag, size = 0x4, scoped, tag = 'scoped memory for tpu_custom_call.1']
    %7 = vsyncpa [#allocation4], 0
    // Predicated region
    $region2: #{tpu_custom_call.1} parent=1 // pred_check
      _
    $region3: #{tpu_custom_call.1} parent=1 // pred_check_branch
      %9 = sbr.rel (0) target = $region5
    $region4: #{tpu_custom_call.1} parent=1 // pred_region
      _
    $region5: #{tpu_custom_call.1} parent=1 // pred_fallthru
      _
    // Predicated region
    $region6: #{tpu_custom_call.1} parent=1 // pred_check
      _
    $region7: #{tpu_custom_call.1} parent=1 // pred_check_branch
      %11 = sbr.rel (0) target = $region9
    $region8: #{tpu_custom_call.1} parent=1 // pred_region
      _
    $region9: #{tpu_custom_call.1} parent=1 // pred_fallthru
      _
    %p12 = scmp.eq.s32.totalorder 0, 0
    // Predicated region
    $region10: #{tpu_custom_call.1} parent=1 // pred_check
      %p13 = pneg %p12
    $region11: #{tpu_custom_call.1} parent=1 // pred_check_branch
      %15 = sbr.rel (%p13) target = $region13
    $region12: #{tpu_custom_call.1} parent=1 // pred_region
      %16 = vst [vmem:[#allocation2] sm:$0xff] 0.0
      %17 = vst [vmem:[#allocation2 + $0x8] sm:$0xff] 0.0
      %18 = vst [vmem:[#allocation2 + $0x10] sm:$0xff] 0.0
      %19 = vst [vmem:[#allocation2 + $0x18] sm:$0xff] 0.0
      %20 = vst [vmem:[#allocation2 + $0x20] sm:$0xff] 0.0
      %21 = vst [vmem:[#allocation2 + $0x28] sm:$0xff] 0.0
      %22 = vst [vmem:[#allocation2 + $0x30] sm:$0xff] 0.0
      %23 = vst [vmem:[#allocation2 + $0x38] sm:$0xff] 0.0
      %24 = vst [vmem:[#allocation2 + $0x40] sm:$0xff] 0.0
      %25 = vst [vmem:[#allocation2 + $0x48] sm:$0xff] 0.0
      %26 = vst [vmem:[#allocation2 + $0x50] sm:$0xff] 0.0
      %27 = vst [vmem:[#allocation2 + $0x58] sm:$0xff] 0.0
      %28 = vst [vmem:[#allocation2 + $0x60] sm:$0xff] 0.0
      %29 = vst [vmem:[#allocation2 + $0x68] sm:$0xff] 0.0
      %30 = vst [vmem:[#allocation2 + $0x70] sm:$0xff] 0.0
      %31 = vst [vmem:[#allocation2 + $0x78] sm:$0xff] 0.0
      %32 = vst [vmem:[#allocation2 + $0x80] sm:$0xff] 0.0
      %33 = vst [vmem:[#allocation2 + $0x88] sm:$0xff] 0.0
      %34 = vst [vmem:[#allocation2 + $0x90] sm:$0xff] 0.0
      %35 = vst [vmem:[#allocation2 + $0x98] sm:$0xff] 0.0
      %36 = vst [vmem:[#allocation2 + $0xa0] sm:$0xff] 0.0
      %37 = vst [vmem:[#allocation2 + $0xa8] sm:$0xff] 0.0
      %38 = vst [vmem:[#allocation2 + $0xb0] sm:$0xff] 0.0
      %39 = vst [vmem:[#allocation2 + $0xb8] sm:$0xff] 0.0
      %40 = vst [vmem:[#allocation2 + $0xc0] sm:$0xff] 0.0
      %41 = vst [vmem:[#allocation2 + $0xc8] sm:$0xff] 0.0
      %42 = vst [vmem:[#allocation2 + $0xd0] sm:$0xff] 0.0
      %43 = vst [vmem:[#allocation2 + $0xd8] sm:$0xff] 0.0
      %44 = vst [vmem:[#allocation2 + $0xe0] sm:$0xff] 0.0
      %45 = vst [vmem:[#allocation2 + $0xe8] sm:$0xff] 0.0
      %46 = vst [vmem:[#allocation2 + $0xf0] sm:$0xff] 0.0
      %47 = vst [vmem:[#allocation2 + $0xf8] sm:$0xff] 0.0
    $region13: #{tpu_custom_call.1} parent=1 // pred_fallthru
      _
    %v48 = vld [vmem:[%s0] sm:$0xff]
    %v49 = vld [vmem:[%s0 + $0x8] sm:$0xff]
    %v50 = vld [vmem:[%s0 + $0x10] sm:$0xff]
    %v51 = vld [vmem:[%s0 + $0x18] sm:$0xff]
    %v52 = vld [vmem:[%s0 + $0x20] sm:$0xff]
    %v53 = vld [vmem:[%s0 + $0x28] sm:$0xff]
    %v54 = vld [vmem:[%s0 + $0x30] sm:$0xff]
    %v55 = vld [vmem:[%s0 + $0x38] sm:$0xff]
    %v56 = vld [vmem:[%s0 + $0x40] sm:$0xff]
    %v57 = vld [vmem:[%s0 + $0x48] sm:$0xff]
    %v58 = vld [vmem:[%s0 + $0x50] sm:$0xff]
    %v59 = vld [vmem:[%s0 + $0x58] sm:$0xff]
    %v60 = vld [vmem:[%s0 + $0x60] sm:$0xff]
    %v61 = vld [vmem:[%s0 + $0x68] sm:$0xff]
    %v62 = vld [vmem:[%s0 + $0x70] sm:$0xff]
    %v63 = vld [vmem:[%s0 + $0x78] sm:$0xff]
    %v64 = vld [vmem:[%s0 + $0x80] sm:$0xff]
    %v65 = vld [vmem:[%s0 + $0x88] sm:$0xff]
    %v66 = vld [vmem:[%s0 + $0x90] sm:$0xff]
    %v67 = vld [vmem:[%s0 + $0x98] sm:$0xff]
    %v68 = vld [vmem:[%s0 + $0xa0] sm:$0xff]
    %v69 = vld [vmem:[%s0 + $0xa8] sm:$0xff]
    %v70 = vld [vmem:[%s0 + $0xb0] sm:$0xff]
    %v71 = vld [vmem:[%s0 + $0xb8] sm:$0xff]
    %v72 = vld [vmem:[%s0 + $0xc0] sm:$0xff]
    %v73 = vld [vmem:[%s0 + $0xc8] sm:$0xff]
    %v74 = vld [vmem:[%s0 + $0xd0] sm:$0xff]
    %v75 = vld [vmem:[%s0 + $0xd8] sm:$0xff]
    %v76 = vld [vmem:[%s0 + $0xe0] sm:$0xff]
    %v77 = vld [vmem:[%s0 + $0xe8] sm:$0xff]
    %v78 = vld [vmem:[%s0 + $0xf0] sm:$0xff]
    %v79 = vld [vmem:[%s0 + $0xf8] sm:$0xff]
    %s80 = smul.u32 0, 64
    %v81 = vlaneseq
    %v82 = vand.u32 %v81, 127
    %v83 = vstv %s80
    %v84 = vadd.s32 %v83, %v82
    %85 = vset.pattern.permute.xlu0 0
    %86 = vperm.xlu0 %85, %v48
    %v87 = vpop.permute.xlu0 %86
    %88 = vset.pattern.permute.xlu0 0
    %89 = vperm.xlu0 %88, %v49
    %v90 = vpop.permute.xlu0 %89
    %91 = vset.pattern.permute.xlu0 0
    %92 = vperm.xlu0 %91, %v50
    %v93 = vpop.permute.xlu0 %92
    %94 = vset.pattern.permute.xlu0 0
    %95 = vperm.xlu0 %94, %v51
    %v96 = vpop.permute.xlu0 %95
    %97 = vset.pattern.permute.xlu0 0
    %98 = vperm.xlu0 %97, %v52
    %v99 = vpop.permute.xlu0 %98
    %100 = vset.pattern.permute.xlu0 0
    %101 = vperm.xlu0 %100, %v53
    %v102 = vpop.permute.xlu0 %101
    %103 = vset.pattern.permute.xlu0 0
    %104 = vperm.xlu0 %103, %v54
    %v105 = vpop.permute.xlu0 %104
    %106 = vset.pattern.permute.xlu0 0
    %107 = vperm.xlu0 %106, %v55
    %v108 = vpop.permute.xlu0 %107
    %109 = vset.pattern.permute.xlu0 0
    %110 = vperm.xlu0 %109, %v56
    %v111 = vpop.permute.xlu0 %110
    %112 = vset.pattern.permute.xlu0 0
    %113 = vperm.xlu0 %112, %v57
    %v114 = vpop.permute.xlu0 %113
    %115 = vset.pattern.permute.xlu0 0
    %116 = vperm.xlu0 %115, %v58
    %v117 = vpop.permute.xlu0 %116
    %118 = vset.pattern.permute.xlu0 0
    %119 = vperm.xlu0 %118, %v59
    %v120 = vpop.permute.xlu0 %119
    %121 = vset.pattern.permute.xlu0 0
    %122 = vperm.xlu0 %121, %v60
    %v123 = vpop.permute.xlu0 %122
    %124 = vset.pattern.permute.xlu0 0
    %125 = vperm.xlu0 %124, %v61
    %v126 = vpop.permute.xlu0 %125
    %127 = vset.pattern.permute.xlu0 0
    %128 = vperm.xlu0 %127, %v62
    %v129 = vpop.permute.xlu0 %128
    %130 = vset.pattern.permute.xlu0 0
    %131 = vperm.xlu0 %130, %v63
    %v132 = vpop.permute.xlu0 %131
    %133 = vset.pattern.permute.xlu0 0
    %134 = vperm.xlu0 %133, %v64
    %v135 = vpop.permute.xlu0 %134
    %136 = vset.pattern.permute.xlu0 0
    %137 = vperm.xlu0 %136, %v65
    %v138 = vpop.permute.xlu0 %137
    %139 = vset.pattern.permute.xlu0 0
    %140 = vperm.xlu0 %139, %v66
    %v141 = vpop.permute.xlu0 %140
    %142 = vset.pattern.permute.xlu0 0
    %143 = vperm.xlu0 %142, %v67
    %v144 = vpop.permute.xlu0 %143
    %145 = vset.pattern.permute.xlu0 0
    %146 = vperm.xlu0 %145, %v68
    %v147 = vpop.permute.xlu0 %146
    %148 = vset.pattern.permute.xlu0 0
    %149 = vperm.xlu0 %148, %v69
    %v150 = vpop.permute.xlu0 %149
    %151 = vset.pattern.permute.xlu0 0
    %152 = vperm.xlu0 %151, %v70
    %v153 = vpop.permute.xlu0 %152
    %154 = vset.pattern.permute.xlu0 0
    %155 = vperm.xlu0 %154, %v71
    %v156 = vpop.permute.xlu0 %155
    %157 = vset.pattern.permute.xlu0 0
    %158 = vperm.xlu0 %157, %v72
    %v159 = vpop.permute.xlu0 %158
    %160 = vset.pattern.permute.xlu0 0
    %161 = vperm.xlu0 %160, %v73
    %v162 = vpop.permute.xlu0 %161
    %163 = vset.pattern.permute.xlu0 0
    %164 = vperm.xlu0 %163, %v74
    %v165 = vpop.permute.xlu0 %164
    %166 = vset.pattern.permute.xlu0 0
    %167 = vperm.xlu0 %166, %v75
    %v168 = vpop.permute.xlu0 %167
    %169 = vset.pattern.permute.xlu0 0
    %170 = vperm.xlu0 %169, %v76
    %v171 = vpop.permute.xlu0 %170
    %172 = vset.pattern.permute.xlu0 0
    %173 = vperm.xlu0 %172, %v77
    %v174 = vpop.permute.xlu0 %173
    %175 = vset.pattern.permute.xlu0 0
    %176 = vperm.xlu0 %175, %v78
    %v177 = vpop.permute.xlu0 %176
    %178 = vset.pattern.permute.xlu0 0
    %179 = vperm.xlu0 %178, %v79
    %v180 = vpop.permute.xlu0 %179
    %vm181 = vcmp.eq.s32.totalorder %v87, %v84
    %vm182 = vcmp.eq.s32.totalorder %v90, %v84
    %vm183 = vcmp.eq.s32.totalorder %v93, %v84
    %vm184 = vcmp.eq.s32.totalorder %v96, %v84
    %vm185 = vcmp.eq.s32.totalorder %v99, %v84
    %vm186 = vcmp.eq.s32.totalorder %v102, %v84
    %vm187 = vcmp.eq.s32.totalorder %v105, %v84
    %vm188 = vcmp.eq.s32.totalorder %v108, %v84
    %vm189 = vcmp.eq.s32.totalorder %v111, %v84
    %vm190 = vcmp.eq.s32.totalorder %v114, %v84
    %vm191 = vcmp.eq.s32.totalorder %v117, %v84
    %vm192 = vcmp.eq.s32.totalorder %v120, %v84
    %vm193 = vcmp.eq.s32.totalorder %v123, %v84
    %vm194 = vcmp.eq.s32.totalorder %v126, %v84
    %vm195 = vcmp.eq.s32.totalorder %v129, %v84
    %vm196 = vcmp.eq.s32.totalorder %v132, %v84
    %vm197 = vcmp.eq.s32.totalorder %v135, %v84
    %vm198 = vcmp.eq.s32.totalorder %v138, %v84
    %vm199 = vcmp.eq.s32.totalorder %v141, %v84
    %vm200 = vcmp.eq.s32.totalorder %v144, %v84
    %vm201 = vcmp.eq.s32.totalorder %v147, %v84
    %vm202 = vcmp.eq.s32.totalorder %v150, %v84
    %vm203 = vcmp.eq.s32.totalorder %v153, %v84
    %vm204 = vcmp.eq.s32.totalorder %v156, %v84
    %vm205 = vcmp.eq.s32.totalorder %v159, %v84
    %vm206 = vcmp.eq.s32.totalorder %v162, %v84
    %vm207 = vcmp.eq.s32.totalorder %v165, %v84
    %vm208 = vcmp.eq.s32.totalorder %v168, %v84
    %vm209 = vcmp.eq.s32.totalorder %v171, %v84
    %vm210 = vcmp.eq.s32.totalorder %v174, %v84
    %vm211 = vcmp.eq.s32.totalorder %v177, %v84
    %vm212 = vcmp.eq.s32.totalorder %v180, %v84
    %v213 = vsel %vm181, 1.0, 0.0
    %v214 = vsel %vm182, 1.0, 0.0
    %v215 = vsel %vm183, 1.0, 0.0
    %v216 = vsel %vm184, 1.0, 0.0
    %v217 = vsel %vm185, 1.0, 0.0
    %v218 = vsel %vm186, 1.0, 0.0
    %v219 = vsel %vm187, 1.0, 0.0
    %v220 = vsel %vm188, 1.0, 0.0
    %v221 = vsel %vm189, 1.0, 0.0
    %v222 = vsel %vm190, 1.0, 0.0
    %v223 = vsel %vm191, 1.0, 0.0
    %v224 = vsel %vm192, 1.0, 0.0
    %v225 = vsel %vm193, 1.0, 0.0
    %v226 = vsel %vm194, 1.0, 0.0
    %v227 = vsel %vm195, 1.0, 0.0
    %v228 = vsel %vm196, 1.0, 0.0
    %v229 = vsel %vm197, 1.0, 0.0
    %v230 = vsel %vm198, 1.0, 0.0
    %v231 = vsel %vm199, 1.0, 0.0
    %v232 = vsel %vm200, 1.0, 0.0
    %v233 = vsel %vm201, 1.0, 0.0
    %v234 = vsel %vm202, 1.0, 0.0
    %v235 = vsel %vm203, 1.0, 0.0
    %v236 = vsel %vm204, 1.0, 0.0
    %v237 = vsel %vm205, 1.0, 0.0
    %v238 = vsel %vm206, 1.0, 0.0
    %v239 = vsel %vm207, 1.0, 0.0
    %v240 = vsel %vm208, 1.0, 0.0
    %v241 = vsel %vm209, 1.0, 0.0
    %v242 = vsel %vm210, 1.0, 0.0
    %v243 = vsel %vm211, 1.0, 0.0
    %v244 = vsel %vm212, 1.0, 0.0
    %v245 = vld [vmem:[#allocation2] sm:$0xff]
    %v246 = vld [vmem:[#allocation2 + $0x8] sm:$0xff]
    %v247 = vld [vmem:[#allocation2 + $0x10] sm:$0xff]
    %v248 = vld [vmem:[#allocation2 + $0x18] sm:$0xff]
    %v249 = vld [vmem:[#allocation2 + $0x20] sm:$0xff]
    %v250 = vld [vmem:[#allocation2 + $0x28] sm:$0xff]
    %v251 = vld [vmem:[#allocation2 + $0x30] sm:$0xff]
    %v252 = vld [vmem:[#allocation2 + $0x38] sm:$0xff]
    %v253 = vld [vmem:[#allocation2 + $0x40] sm:$0xff]
    %v254 = vld [vmem:[#allocation2 + $0x48] sm:$0xff]
    %v255 = vld [vmem:[#allocation2 + $0x50] sm:$0xff]
    %v256 = vld [vmem:[#allocation2 + $0x58] sm:$0xff]
    %v257 = vld [vmem:[#allocation2 + $0x60] sm:$0xff]
    %v258 = vld [vmem:[#allocation2 + $0x68] sm:$0xff]
    %v259 = vld [vmem:[#allocation2 + $0x70] sm:$0xff]
    %v260 = vld [vmem:[#allocation2 + $0x78] sm:$0xff]
    %v261 = vld [vmem:[#allocation2 + $0x80] sm:$0xff]
    %v262 = vld [vmem:[#allocation2 + $0x88] sm:$0xff]
    %v263 = vld [vmem:[#allocation2 + $0x90] sm:$0xff]
    %v264 = vld [vmem:[#allocation2 + $0x98] sm:$0xff]
    %v265 = vld [vmem:[#allocation2 + $0xa0] sm:$0xff]
    %v266 = vld [vmem:[#allocation2 + $0xa8] sm:$0xff]
    %v267 = vld [vmem:[#allocation2 + $0xb0] sm:$0xff]
    %v268 = vld [vmem:[#allocation2 + $0xb8] sm:$0xff]
    %v269 = vld [vmem:[#allocation2 + $0xc0] sm:$0xff]
    %v270 = vld [vmem:[#allocation2 + $0xc8] sm:$0xff]
    %v271 = vld [vmem:[#allocation2 + $0xd0] sm:$0xff]
    %v272 = vld [vmem:[#allocation2 + $0xd8] sm:$0xff]
    %v273 = vld [vmem:[#allocation2 + $0xe0] sm:$0xff]
    %v274 = vld [vmem:[#allocation2 + $0xe8] sm:$0xff]
    %v275 = vld [vmem:[#allocation2 + $0xf0] sm:$0xff]
    %v276 = vld [vmem:[#allocation2 + $0xf8] sm:$0xff]
    %v277 = vld [vmem:[%s1] sm:$0xff]
    %v278 = vld [vmem:[%s1 + $0x8] sm:$0xff]
    %v279 = vld [vmem:[%s1 + $0x10] sm:$0xff]
    %v280 = vld [vmem:[%s1 + $0x18] sm:$0xff]
    %v281 = vld [vmem:[%s1 + $0x20] sm:$0xff]
    %v282 = vld [vmem:[%s1 + $0x28] sm:$0xff]
    %v283 = vld [vmem:[%s1 + $0x30] sm:$0xff]
    %v284 = vld [vmem:[%s1 + $0x38] sm:$0xff]
    %vm285 = vcmask 523264
    %v287 = vsel %vm285, %v213, 0
    %v290 = vsel %vm285, %v214, 0
    %v293 = vsel %vm285, %v215, 0
    %v296 = vsel %vm285, %v216, 0
    %v299 = vsel %vm285, %v217, 0
    %v302 = vsel %vm285, %v218, 0
    %v305 = vsel %vm285, %v219, 0
    %v308 = vsel %vm285, %v220, 0
    %v311 = vsel %vm285, %v221, 0
    %v314 = vsel %vm285, %v222, 0
    %v317 = vsel %vm285, %v223, 0
    %v320 = vsel %vm285, %v224, 0
    %v323 = vsel %vm285, %v225, 0
    %v326 = vsel %vm285, %v226, 0
    %v329 = vsel %vm285, %v227, 0
    %v332 = vsel %vm285, %v228, 0
    %v335 = vsel %vm285, %v229, 0
    %v338 = vsel %vm285, %v230, 0
    %v341 = vsel %vm285, %v231, 0
    %v344 = vsel %vm285, %v232, 0
    %v347 = vsel %vm285, %v233, 0
    %v350 = vsel %vm285, %v234, 0
    %v353 = vsel %vm285, %v235, 0
    %v356 = vsel %vm285, %v236, 0
    %v359 = vsel %vm285, %v237, 0
    %v362 = vsel %vm285, %v238, 0
    %v365 = vsel %vm285, %v239, 0
    %v368 = vsel %vm285, %v240, 0
    %v371 = vsel %vm285, %v241, 0
    %v374 = vsel %vm285, %v242, 0
    %v377 = vsel %vm285, %v243, 0
    %v380 = vsel %vm285, %v244, 0
    %382 = vmatprep.subr.mxu0 0.0
    %v383 = vand.u32 %v277, 4294901760
    %384 = vmatpush1.msra.mxu0 %v383
    %385 = vmatprep.subr.mxu0 0.0
    %v386 = vand.u32 %v278, 4294901760
    %387 = vmatpush1.msra.mxu0 %v386
    %388 = vmatprep.subr.mxu0 0.0
    %v389 = vand.u32 %v279, 4294901760
    %390 = vmatpush1.msra.mxu0 %v389
    %391 = vmatprep.subr.mxu0 0.0
    %v392 = vand.u32 %v280, 4294901760
    %393 = vmatpush1.msra.mxu0 %v392
    %394 = vmatprep.subr.mxu0 0.0
    %v395 = vand.u32 %v281, 4294901760
    %396 = vmatpush1.msra.mxu0 %v395
    %397 = vmatprep.subr.mxu0 0.0
    %v398 = vand.u32 %v282, 4294901760
    %399 = vmatpush1.msra.mxu0 %v398
    %400 = vmatprep.subr.mxu0 0.0
    %v401 = vand.u32 %v283, 4294901760
    %402 = vmatpush1.msra.mxu0 %v401
    %403 = vmatprep.subr.mxu0 0.0
    %v404 = vand.u32 %v284, 4294901760
    %405 = vmatpush1.msra.mxu0 %v404
    %406 = vmatprep.subr.mxu0 0.0
    %407 = vmatpush1.msra.mxu0 0.0
    %408 = vmatprep.subr.mxu0 0.0
    %409 = vmatpush1.msra.mxu0 0.0
    %410 = vmatprep.subr.mxu0 0.0
    %411 = vmatpush1.msra.mxu0 0.0
    %412 = vmatprep.subr.mxu0 0.0
    %413 = vmatpush1.msra.mxu0 0.0
    %414 = vmatprep.subr.mxu0 0.0
    %415 = vmatpush1.msra.mxu0 0.0
    %416 = vmatprep.subr.mxu0 0.0
    %417 = vmatpush1.msra.mxu0 0.0
    %418 = vmatprep.subr.mxu0 0.0
    %419 = vmatpush1.msra.mxu0 0.0
    %420 = vmatprep.subr.mxu0 0.0
    %421 = vmatpush1.msra.mxu0 0.0
    %422 = vmatprep.subr.mxu0 0.0
    %423 = vmatpush1.msra.mxu0 0.0
    %424 = vmatprep.subr.mxu0 0.0
    %425 = vmatpush1.msra.mxu0 0.0
    %426 = vmatprep.subr.mxu0 0.0
    %427 = vmatpush1.msra.mxu0 0.0
    %428 = vmatprep.subr.mxu0 0.0
    %429 = vmatpush1.msra.mxu0 0.0
    %430 = vmatprep.subr.mxu0 0.0
    %431 = vmatpush1.msra.mxu0 0.0
    %432 = vmatprep.subr.mxu0 0.0
    %433 = vmatpush1.msra.mxu0 0.0
    %434 = vmatprep.subr.mxu0 0.0
    %435 = vmatpush1.msra.mxu0 0.0
    %436 = vmatprep.subr.mxu0 0.0
    %437 = vmatpush1.msra.mxu0 0.0
    %438 = vmatprep.subr.mxu0 0.0
    %439 = vmatpush1.msra.mxu0 0.0
    %440 = vmatprep.subr.mxu0 0.0
    %441 = vmatpush1.msra.mxu0 0.0
    %442 = vmatprep.subr.mxu0 0.0
    %443 = vmatpush1.msra.mxu0 0.0
    %444 = vmatprep.subr.mxu0 0.0
    %445 = vmatpush1.msra.mxu0 0.0
    %446 = vmatprep.subr.mxu0 0.0
    %447 = vmatpush1.msra.mxu0 0.0
    %448 = vmatprep.subr.mxu0 0.0
    %449 = vmatpush1.msra.mxu0 0.0
    %450 = vmatprep.subr.mxu0 0.0
    %451 = vmatpush1.msra.mxu0 0.0
    %452 = vmatprep.subr.mxu0 0.0
    %453 = vmatpush1.msra.mxu0 0.0
    %454 = vmatprep.mubr.f32.mxu0 0.0
    %v455 = vand.u32 %v287, 4294901760
    %v456 = vsub.f32 %v287, %v455
    %v457 = vand.u32 %v456, 4294901760
    %v458 = vsub.f32 %v456, %v457
    %v459 = vand.u32 %v458, 4294901760
    %460 = vmatmul.mubr.f32.gmra.mrb[0].mxu0 %v459
    %v461 = vpop.f32.mrb[0].mxu0
    %v462 = vadd.f32 0.0, %v461
    %v463 = vpop.f32.mrb[0].mxu0
    %464 = vmatprep.mubr.f32.mxu0 0.0
    %v465 = vand.u32 %v290, 4294901760
    %v466 = vsub.f32 %v290, %v465
    %v467 = vand.u32 %v466, 4294901760
    %v468 = vsub.f32 %v466, %v467
    %v469 = vand.u32 %v468, 4294901760
    %470 = vmatmul.mubr.f32.gmra.mrb[0].mxu0 %v469
    %v471 = vpop.f32.mrb[0].mxu0
    %v472 = vadd.f32 0.0, %v471
    %v473 = vpop.f32.mrb[0].mxu0
    %474 = vmatprep.mubr.f32.mxu0 0.0
    %v475 = vand.u32 %v293, 4294901760
    %v476 = vsub.f32 %v293, %v475
    %v477 = vand.u32 %v476, 4294901760
    %v478 = vsub.f32 %v476, %v477
    %v479 = vand.u32 %v478, 4294901760
    %480 = vmatmul.mubr.f32.gmra.mrb[0].mxu0 %v479
    %v481 = vpop.f32.mrb[0].mxu0
    %v482 = vadd.f32 0.0, %v481
    %v483 = vpop.f32.mrb[0].mxu0
    %484 = vmatprep.mubr.f32.mxu0 0.0
    %v485 = vand.u32 %v296, 4294901760
    %v486 = vsub.f32 %v296, %v485
    %v487 = vand.u32 %v486, 4294901760
    %v488 = vsub.f32 %v486, %v487
    %v489 = vand.u32 %v488, 4294901760
    %490 = vmatmul.mubr.f32.gmra.mrb[0].mxu0 %v489
    %v491 = vpop.f32.mrb[0].mxu0
    %v492 = vadd.f32 0.0, %v491
    %v493 = vpop.f32.mrb[0].mxu0
    %494 = vmatprep.mubr.f32.mxu0 0.0
    %v495 = vand.u32 %v299, 4294901760
    %v496 = vsub.f32 %v299, %v495
    %v497 = vand.u32 %v496, 4294901760
    %v498 = vsub.f32 %v496, %v497
    %v499 = vand.u32 %v498, 4294901760
    %500 = vmatmul.mubr.f32.gmra.mrb[0].mxu0 %v499
    %v501 = vpop.f32.mrb[0].mxu0
    %v502 = vadd.f32 0.0, %v501
    %v503 = vpop.f32.mrb[0].mxu0
    %504 = vmatprep.mubr.f32.mxu0 0.0
    %v505 = vand.u32 %v302, 4294901760
    %v506 = vsub.f32 %v302, %v505
    %v507 = vand.u32 %v506, 4294901760
    %v508 = vsub.f32 %v506, %v507
    %v509 = vand.u32 %v508, 4294901760
    %510 = vmatmul.mubr.f32.gmra.mrb[0].mxu0 %v509
    %v511 = vpop.f32.mrb[0].mxu0
    %v512 = vadd.f32 0.0, %v511
    %v513 = vpop.f32.mrb[0].mxu0
    %514 = vmatprep.mubr.f32.mxu0 0.0
    %v515 = vand.u32 %v305, 4294901760
    %v516 = vsub.f32 %v305, %v515
    %v517 = vand.u32 %v516, 4294901760
    %v518 = vsub.f32 %v516, %v517
    %v519 = vand.u32 %v518, 4294901760
    %520 = vmatmul.mubr.f32.gmra.mrb[0].mxu0 %v519
    %v521 = vpop.f32.mrb[0].mxu0
    %v522 = vadd.f32 0.0, %v521
    %v523 = vpop.f32.mrb[0].mxu0
    %524 = vmatprep.mubr.f32.mxu0 0.0
    %v525 = vand.u32 %v308, 4294901760
    %v526 = vsub.f32 %v308, %v525
    %v527 = vand.u32 %v526, 4294901760
    %v528 = vsub.f32 %v526, %v527
    %v529 = vand.u32 %v528, 4294901760
    %530 = vmatmul.mubr.f32.gmra.mrb[0].mxu0 %v529
    %v531 = vpop.f32.mrb[0].mxu0
    %v532 = vadd.f32 0.0, %v531
    %v533 = vpop.f32.mrb[0].mxu0
    %534 = vmatprep.mubr.f32.mxu0 0.0
    %v535 = vand.u32 %v311, 4294901760
    %v536 = vsub.f32 %v311, %v535
    %v537 = vand.u32 %v536, 4294901760
    %v538 = vsub.f32 %v536, %v537
    %v539 = vand.u32 %v538, 4294901760
    %540 = vmatmul.mubr.f32.gmra.mrb[0].mxu0 %v539
    %v541 = vpop.f32.mrb[0].mxu0
    %v542 = vadd.f32 0.0, %v541
    %v543 = vpop.f32.mrb[0].mxu0
    %544 = vmatprep.mubr.f32.mxu0 0.0
    %v545 = vand.u32 %v314, 4294901760
    %v546 = vsub.f32 %v314, %v545
    %v547 = vand.u32 %v546, 4294901760
    %v548 = vsub.f32 %v546, %v547
    %v549 = vand.u32 %v548, 4294901760
    %550 = vmatmul.mubr.f32.gmra.mrb[0].mxu0 %v549
    %v551 = vpop.f32.mrb[0].mxu0
    %v552 = vadd.f32 0.0, %v551
    %v553 = vpop.f32.mrb[0].mxu0
    %554 = vmatprep.mubr.f32.mxu0 0.0
    %v555 = vand.u32 %v317, 4294901760
    %v556 = vsub.f32 %v317, %v555
    %v557 = vand.u32 %v556, 4294901760
    %v558 = vsub.f32 %v556, %v557
    %v559 = vand.u32 %v558, 4294901760
    %560 = vmatmul.mubr.f32.gmra.mrb[0].mxu0 %v559
    %v561 = vpop.f32.mrb[0].mxu0
    %v562 = vadd.f32 0.0, %v561
    %v563 = vpop.f32.mrb[0].mxu0
    %564 = vmatprep.mubr.f32.mxu0 0.0
    %v565 = vand.u32 %v320, 4294901760
    %v566 = vsub.f32 %v320, %v565
    %v567 = vand.u32 %v566, 4294901760
    %v568 = vsub.f32 %v566, %v567
    %v569 = vand.u32 %v568, 4294901760
    %570 = vmatmul.mubr.f32.gmra.mrb[0].mxu0 %v569
    %v571 = vpop.f32.mrb[0].mxu0
    %v572 = vadd.f32 0.0, %v571
    %v573 = vpop.f32.mrb[0].mxu0
    %574 = vmatprep.mubr.f32.mxu0 0.0
    %v575 = vand.u32 %v323, 4294901760
    %v576 = vsub.f32 %v323, %v575
    %v577 = vand.u32 %v576, 4294901760
    %v578 = vsub.f32 %v576, %v577
    %v579 = vand.u32 %v578, 4294901760
    %580 = vmatmul.mubr.f32.gmra.mrb[0].mxu0 %v579
    %v581 = vpop.f32.mrb[0].mxu0
    %v582 = vadd.f32 0.0, %v581
    %v583 = vpop.f32.mrb[0].mxu0
    %584 = vmatprep.mubr.f32.mxu0 0.0
    %v585 = vand.u32 %v326, 4294901760
    %v586 = vsub.f32 %v326, %v585
    %v587 = vand.u32 %v586, 4294901760
    %v588 = vsub.f32 %v586, %v587
    %v589 = vand.u32 %v588, 4294901760
    %590 = vmatmul.mubr.f32.gmra.mrb[0].mxu0 %v589
    %v591 = vpop.f32.mrb[0].mxu0
    %v592 = vadd.f32 0.0, %v591
    %v593 = vpop.f32.mrb[0].mxu0
    %594 = vmatprep.mubr.f32.mxu0 0.0
    %v595 = vand.u32 %v329, 4294901760
    %v596 = vsub.f32 %v329, %v595
    %v597 = vand.u32 %v596, 4294901760
    %v598 = vsub.f32 %v596, %v597
    %v599 = vand.u32 %v598, 4294901760
    %600 = vmatmul.mubr.f32.gmra.mrb[0].mxu0 %v599
    %v601 = vpop.f32.mrb[0].mxu0
    %v602 = vadd.f32 0.0, %v601
    %v603 = vpop.f32.mrb[0].mxu0
    %604 = vmatprep.mubr.f32.mxu0 0.0
    %v605 = vand.u32 %v332, 4294901760
    %v606 = vsub.f32 %v332, %v605
    %v607 = vand.u32 %v606, 4294901760
    %v608 = vsub.f32 %v606, %v607
    %v609 = vand.u32 %v608, 4294901760
    %610 = vmatmul.mubr.f32.gmra.mrb[0].mxu0 %v609
    %v611 = vpop.f32.mrb[0].mxu0
    %v612 = vadd.f32 0.0, %v611
    %v613 = vpop.f32.mrb[0].mxu0
    %614 = vmatprep.mubr.f32.mxu0 0.0
    %v615 = vand.u32 %v335, 4294901760
    %v616 = vsub.f32 %v335, %v615
    %v617 = vand.u32 %v616, 4294901760
    %v618 = vsub.f32 %v616, %v617
    %v619 = vand.u32 %v618, 4294901760
    %620 = vmatmul.mubr.f32.gmra.mrb[0].mxu0 %v619
    %v621 = vpop.f32.mrb[0].mxu0
    %v622 = vadd.f32 0.0, %v621
    %v623 = vpop.f32.mrb[0].mxu0
    %624 = vmatprep.mubr.f32.mxu0 0.0
    %v625 = vand.u32 %v338, 4294901760
    %v626 = vsub.f32 %v338, %v625
    %v627 = vand.u32 %v626, 4294901760
    %v628 = vsub.f32 %v626, %v627
    %v629 = vand.u32 %v628, 4294901760
    %630 = vmatmul.mubr.f32.gmra.mrb[0].mxu0 %v629
    %v631 = vpop.f32.mrb[0].mxu0
    %v632 = vadd.f32 0.0, %v631
    %v633 = vpop.f32.mrb[0].mxu0
    %634 = vmatprep.mubr.f32.mxu0 0.0
    %v635 = vand.u32 %v341, 4294901760
    %v636 = vsub.f32 %v341, %v635
    %v637 = vand.u32 %v636, 4294901760
    %v638 = vsub.f32 %v636, %v637
    %v639 = vand.u32 %v638, 4294901760
    %640 = vmatmul.mubr.f32.gmra.mrb[0].mxu0 %v639
    %v641 = vpop.f32.mrb[0].mxu0
    %v642 = vadd.f32 0.0, %v641
    %v643 = vpop.f32.mrb[0].mxu0
    %644 = vmatprep.mubr.f32.mxu0 0.0
    %v645 = vand.u32 %v344, 4294901760
    %v646 = vsub.f32 %v344, %v645
    %v647 = vand.u32 %v646, 4294901760
    %v648 = vsub.f32 %v646, %v647
    %v649 = vand.u32 %v648, 4294901760
    %650 = vmatmul.mubr.f32.gmra.mrb[0].mxu0 %v649
    %v651 = vpop.f32.mrb[0].mxu0
    %v652 = vadd.f32 0.0, %v651
    %v653 = vpop.f32.mrb[0].mxu0
    %654 = vmatprep.mubr.f32.mxu0 0.0
    %v655 = vand.u32 %v347, 4294901760
    %v656 = vsub.f32 %v347, %v655
    %v657 = vand.u32 %v656, 4294901760
    %v658 = vsub.f32 %v656, %v657
    %v659 = vand.u32 %v658, 4294901760
    %660 = vmatmul.mubr.f32.gmra.mrb[0].mxu0 %v659
    %v661 = vpop.f32.mrb[0].mxu0
    %v662 = vadd.f32 0.0, %v661
    %v663 = vpop.f32.mrb[0].mxu0
    %664 = vmatprep.mubr.f32.mxu0 0.0
    %v665 = vand.u32 %v350, 4294901760
    %v666 = vsub.f32 %v350, %v665
    %v667 = vand.u32 %v666, 4294901760
    %v668 = vsub.f32 %v666, %v667
    %v669 = vand.u32 %v668, 4294901760
    %670 = vmatmul.mubr.f32.gmra.mrb[0].mxu0 %v669
    %v671 = vpop.f32.mrb[0].mxu0
    %v672 = vadd.f32 0.0, %v671
    %v673 = vpop.f32.mrb[0].mxu0
    %674 = vmatprep.mubr.f32.mxu0 0.0
    %v675 = vand.u32 %v353, 4294901760
    %v676 = vsub.f32 %v353, %v675
    %v677 = vand.u32 %v676, 4294901760
    %v678 = vsub.f32 %v676, %v677
    %v679 = vand.u32 %v678, 4294901760
    %680 = vmatmul.mubr.f32.gmra.mrb[0].mxu0 %v679
    %v681 = vpop.f32.mrb[0].mxu0
    %v682 = vadd.f32 0.0, %v681
    %v683 = vpop.f32.mrb[0].mxu0
    %684 = vmatprep.mubr.f32.mxu0 0.0
    %v685 = vand.u32 %v356, 4294901760
    %v686 = vsub.f32 %v356, %v685
    %v687 = vand.u32 %v686, 4294901760
    %v688 = vsub.f32 %v686, %v687
    %v689 = vand.u32 %v688, 4294901760
    %690 = vmatmul.mubr.f32.gmra.mrb[0].mxu0 %v689
    %v691 = vpop.f32.mrb[0].mxu0
    %v692 = vadd.f32 0.0, %v691
    %v693 = vpop.f32.mrb[0].mxu0
    %694 = vmatprep.mubr.f32.mxu0 0.0
    %v695 = vand.u32 %v359, 4294901760
    %v696 = vsub.f32 %v359, %v695
    %v697 = vand.u32 %v696, 4294901760
    %v698 = vsub.f32 %v696, %v697
    %v699 = vand.u32 %v698, 4294901760
    %700 = vmatmul.mubr.f32.gmra.mrb[0].mxu0 %v699
    %v701 = vpop.f32.mrb[0].mxu0
    %v702 = vadd.f32 0.0, %v701
    %v703 = vpop.f32.mrb[0].mxu0
    %704 = vmatprep.mubr.f32.mxu0 0.0
    %v705 = vand.u32 %v362, 4294901760
    %v706 = vsub.f32 %v362, %v705
    %v707 = vand.u32 %v706, 4294901760
    %v708 = vsub.f32 %v706, %v707
    %v709 = vand.u32 %v708, 4294901760
    %710 = vmatmul.mubr.f32.gmra.mrb[0].mxu0 %v709
    %v711 = vpop.f32.mrb[0].mxu0
    %v712 = vadd.f32 0.0, %v711
    %v713 = vpop.f32.mrb[0].mxu0
    %714 = vmatprep.mubr.f32.mxu0 0.0
    %v715 = vand.u32 %v365, 4294901760
    %v716 = vsub.f32 %v365, %v715
    %v717 = vand.u32 %v716, 4294901760
    %v718 = vsub.f32 %v716, %v717
    %v719 = vand.u32 %v718, 4294901760
    %720 = vmatmul.mubr.f32.gmra.mrb[0].mxu0 %v719
    %v721 = vpop.f32.mrb[0].mxu0
    %v722 = vadd.f32 0.0, %v721
    %v723 = vpop.f32.mrb[0].mxu0
    %724 = vmatprep.mubr.f32.mxu0 0.0
    %v725 = vand.u32 %v368, 4294901760
    %v726 = vsub.f32 %v368, %v725
    %v727 = vand.u32 %v726, 4294901760
    %v728 = vsub.f32 %v726, %v727
    %v729 = vand.u32 %v728, 4294901760
    %730 = vmatmul.mubr.f32.gmra.mrb[0].mxu0 %v729
    %v731 = vpop.f32.mrb[0].mxu0
    %v732 = vadd.f32 0.0, %v731
    %v733 = vpop.f32.mrb[0].mxu0
    %734 = vmatprep.mubr.f32.mxu0 0.0
    %v735 = vand.u32 %v371, 4294901760
    %v736 = vsub.f32 %v371, %v735
    %v737 = vand.u32 %v736, 4294901760
    %v738 = vsub.f32 %v736, %v737
    %v739 = vand.u32 %v738, 4294901760
    %740 = vmatmul.mubr.f32.gmra.mrb[0].mxu0 %v739
    %v741 = vpop.f32.mrb[0].mxu0
    %v742 = vadd.f32 0.0, %v741
    %v743 = vpop.f32.mrb[0].mxu0
    %744 = vmatprep.mubr.f32.mxu0 0.0
    %v745 = vand.u32 %v374, 4294901760
    %v746 = vsub.f32 %v374, %v745
    %v747 = vand.u32 %v746, 4294901760
    %v748 = vsub.f32 %v746, %v747
    %v749 = vand.u32 %v748, 4294901760
    %750 = vmatmul.mubr.f32.gmra.mrb[0].mxu0 %v749
    %v751 = vpop.f32.mrb[0].mxu0
    %v752 = vadd.f32 0.0, %v751
    %v753 = vpop.f32.mrb[0].mxu0
    %754 = vmatprep.mubr.f32.mxu0 0.0
    %v755 = vand.u32 %v377, 4294901760
    %v756 = vsub.f32 %v377, %v755
    %v757 = vand.u32 %v756, 4294901760
    %v758 = vsub.f32 %v756, %v757
    %v759 = vand.u32 %v758, 4294901760
    %760 = vmatmul.mubr.f32.gmra.mrb[0].mxu0 %v759
    %v761 = vpop.f32.mrb[0].mxu0
    %v762 = vadd.f32 0.0, %v761
    %v763 = vpop.f32.mrb[0].mxu0
    %764 = vmatprep.mubr.f32.mxu0 0.0
    %v765 = vand.u32 %v380, 4294901760
    %v766 = vsub.f32 %v380, %v765
    %v767 = vand.u32 %v766, 4294901760
    %v768 = vsub.f32 %v766, %v767
    %v769 = vand.u32 %v768, 4294901760
    %770 = vmatmul.mubr.f32.gmra.mrb[0].mxu0 %v769
    %v771 = vpop.f32.mrb[0].mxu0
    %v772 = vadd.f32 0.0, %v771
    %v773 = vpop.f32.mrb[0].mxu0
    %774 = vdwg.mxu0
    %775 = vmatprep.subr.mxu0 0.0
    %v776 = vand.u32 %v277, 4294901760
    %v777 = vsub.f32 %v277, %v776
    %v778 = vand.u32 %v777, 4294901760
    %v779 = vsub.f32 %v777, %v778
    %v780 = vand.u32 %v779, 4294901760
    %781 = vmatpush1.msra.mxu0 %v780
    %782 = vmatprep.subr.mxu0 0.0
    %v783 = vand.u32 %v278, 4294901760
    %v784 = vsub.f32 %v278, %v783
    %v785 = vand.u32 %v784, 4294901760
    %v786 = vsub.f32 %v784, %v785
    %v787 = vand.u32 %v786, 4294901760
    %788 = vmatpush1.msra.mxu0 %v787
    %789 = vmatprep.subr.mxu0 0.0
    %v790 = vand.u32 %v279, 4294901760
    %v791 = vsub.f32 %v279, %v790
    %v792 = vand.u32 %v791, 4294901760
    %v793 = vsub.f32 %v791, %v792
    %v794 = vand.u32 %v793, 4294901760
    %795 = vmatpush1.msra.mxu0 %v794
    %796 = vmatprep.subr.mxu0 0.0
    %v797 = vand.u32 %v280, 4294901760
    %v798 = vsub.f32 %v280, %v797
    %v799 = vand.u32 %v798, 4294901760
    %v800 = vsub.f32 %v798, %v799
    %v801 = vand.u32 %v800, 4294901760
    %802 = vmatpush1.msra.mxu0 %v801
    %803 = vmatprep.subr.mxu0 0.0
    %v804 = vand.u32 %v281, 4294901760
    %v805 = vsub.f32 %v281, %v804
    %v806 = vand.u32 %v805, 4294901760
    %v807 = vsub.f32 %v805, %v806
    %v808 = vand.u32 %v807, 4294901760
    %809 = vmatpush1.msra.mxu0 %v808
    %810 = vmatprep.subr.mxu0 0.0
    %v811 = vand.u32 %v282, 4294901760
    %v812 = vsub.f32 %v282, %v811
    %v813 = vand.u32 %v812, 4294901760
    %v814 = vsub.f32 %v812, %v813
    %v815 = vand.u32 %v814, 4294901760
    %816 = vmatpush1.msra.mxu0 %v815
    %817 = vmatprep.subr.mxu0 0.0
    %v818 = vand.u32 %v283, 4294901760
    %v819 = vsub.f32 %v283, %v818
    %v820 = vand.u32 %v819, 4294901760
    %v821 = vsub.f32 %v819, %v820
    %v822 = vand.u32 %v821, 4294901760
    %823 = vmatpush1.msra.mxu0 %v822
    %824 = vmatprep.subr.mxu0 0.0
    %v825 = vand.u32 %v284, 4294901760
    %v826 = vsub.f32 %v284, %v825
    %v827 = vand.u32 %v826, 4294901760
    %v828 = vsub.f32 %v826, %v827
    %v829 = vand.u32 %v828, 4294901760
    %830 = vmatpush1.msra.mxu0 %v829
    %831 = vmatprep.subr.mxu0 0.0
    %832 = vmatpush1.msra.mxu0 0.0
    %833 = vmatprep.subr.mxu0 0.0
    %834 = vmatpush1.msra.mxu0 0.0
    %835 = vmatprep.subr.mxu0 0.0
    %836 = vmatpush1.msra.mxu0 0.0
    %837 = vmatprep.subr.mxu0 0.0
    %838 = vmatpush1.msra.mxu0 0.0
    %839 = vmatprep.subr.mxu0 0.0
    %840 = vmatpush1.msra.mxu0 0.0
    %841 = vmatprep.subr.mxu0 0.0
    %842 = vmatpush1.msra.mxu0 0.0
    %843 = vmatprep.subr.mxu0 0.0
    %844 = vmatpush1.msra.mxu0 0.0
    %845 = vmatprep.subr.mxu0 0.0
    %846 = vmatpush1.msra.mxu0 0.0
    %847 = vmatprep.subr.mxu0 0.0
    %848 = vmatpush1.msra.mxu0 0.0
    %849 = vmatprep.subr.mxu0 0.0
    %850 = vmatpush1.msra.mxu0 0.0
    %851 = vmatprep.subr.mxu0 0.0
    %852 = vmatpush1.msra.mxu0 0.0
    %853 = vmatprep.subr.mxu0 0.0
    %854 = vmatpush1.msra.mxu0 0.0
    %855 = vmatprep.subr.mxu0 0.0
    %856 = vmatpush1.msra.mxu0 0.0
    %857 = vmatprep.subr.mxu0 0.0
    %858 = vmatpush1.msra.mxu0 0.0
    %859 = vmatprep.subr.mxu0 0.0
    %860 = vmatpush1.msra.mxu0 0.0
    %861 = vmatprep.subr.mxu0 0.0
    %862 = vmatpush1.msra.mxu0 0.0
    %863 = vmatprep.subr.mxu0 0.0
    %864 = vmatpush1.msra.mxu0 0.0
    %865 = vmatprep.subr.mxu0 0.0
    %866 = vmatpush1.msra.mxu0 0.0
    %867 = vmatprep.subr.mxu0 0.0
    %868 = vmatpush1.msra.mxu0 0.0
    %869 = vmatprep.subr.mxu0 0.0
    %870 = vmatpush1.msra.mxu0 0.0
    %871 = vmatprep.subr.mxu0 0.0
    %872 = vmatpush1.msra.mxu0 0.0
    %873 = vmatprep.subr.mxu0 0.0
    %874 = vmatpush1.msra.mxu0 0.0
    %875 = vmatprep.subr.mxu0 0.0
    %876 = vmatpush1.msra.mxu0 0.0
    %877 = vmatprep.subr.mxu0 0.0
    %878 = vmatpush1.msra.mxu0 0.0
    %879 = vmatprep.mubr.f32.mxu0 0.0
    %v880 = vand.u32 %v287, 4294901760
    %881 = vmatmul.mubr.f32.gmra.mrb[0].mxu0 %v880
    %v882 = vpop.f32.mrb[0].mxu0
    %v883 = vadd.f32 %v462, %v882
    %v884 = vpop.f32.mrb[0].mxu0
    %885 = vmatprep.mubr.f32.mxu0 0.0
    %v886 = vand.u32 %v290, 4294901760
    %887 = vmatmul.mubr.f32.gmra.mrb[0].mxu0 %v886
    %v888 = vpop.f32.mrb[0].mxu0
    %v889 = vadd.f32 %v472, %v888
    %v890 = vpop.f32.mrb[0].mxu0
    %891 = vmatprep.mubr.f32.mxu0 0.0
    %v892 = vand.u32 %v293, 4294901760
    %893 = vmatmul.mubr.f32.gmra.mrb[0].mxu0 %v892
    %v894 = vpop.f32.mrb[0].mxu0
    %v895 = vadd.f32 %v482, %v894
    %v896 = vpop.f32.mrb[0].mxu0
    %897 = vmatprep.mubr.f32.mxu0 0.0
    %v898 = vand.u32 %v296, 4294901760
    %899 = vmatmul.mubr.f32.gmra.mrb[0].mxu0 %v898
    %v900 = vpop.f32.mrb[0].mxu0
    %v901 = vadd.f32 %v492, %v900
    %v902 = vpop.f32.mrb[0].mxu0
    %903 = vmatprep.mubr.f32.mxu0 0.0
    %v904 = vand.u32 %v299, 4294901760
    %905 = vmatmul.mubr.f32.gmra.mrb[0].mxu0 %v904
    %v906 = vpop.f32.mrb[0].mxu0
    %v907 = vadd.f32 %v502, %v906
    %v908 = vpop.f32.mrb[0].mxu0
    %909 = vmatprep.mubr.f32.mxu0 0.0
    %v910 = vand.u32 %v302, 4294901760
    %911 = vmatmul.mubr.f32.gmra.mrb[0].mxu0 %v910
    %v912 = vpop.f32.mrb[0].mxu0
    %v913 = vadd.f32 %v512, %v912
    %v914 = vpop.f32.mrb[0].mxu0
    %915 = vmatprep.mubr.f32.mxu0 0.0
    %v916 = vand.u32 %v305, 4294901760
    %917 = vmatmul.mubr.f32.gmra.mrb[0].mxu0 %v916
    %v918 = vpop.f32.mrb[0].mxu0
    %v919 = vadd.f32 %v522, %v918
    %v920 = vpop.f32.mrb[0].mxu0
    %921 = vmatprep.mubr.f32.mxu0 0.0
    %v922 = vand.u32 %v308, 4294901760
    %923 = vmatmul.mubr.f32.gmra.mrb[0].mxu0 %v922
    %v924 = vpop.f32.mrb[0].mxu0
    %v925 = vadd.f32 %v532, %v924
    %v926 = vpop.f32.mrb[0].mxu0
    %927 = vmatprep.mubr.f32.mxu0 0.0
    %v928 = vand.u32 %v311, 4294901760
    %929 = vmatmul.mubr.f32.gmra.mrb[0].mxu0 %v928
    %v930 = vpop.f32.mrb[0].mxu0
    %v931 = vadd.f32 %v542, %v930
    %v932 = vpop.f32.mrb[0].mxu0
    %933 = vmatprep.mubr.f32.mxu0 0.0
    %v934 = vand.u32 %v314, 4294901760
    %935 = vmatmul.mubr.f32.gmra.mrb[0].mxu0 %v934
    %v936 = vpop.f32.mrb[0].mxu0
    %v937 = vadd.f32 %v552, %v936
    %v938 = vpop.f32.mrb[0].mxu0
    %939 = vmatprep.mubr.f32.mxu0 0.0
    %v940 = vand.u32 %v317, 4294901760
    %941 = vmatmul.mubr.f32.gmra.mrb[0].mxu0 %v940
    %v942 = vpop.f32.mrb[0].mxu0
    %v943 = vadd.f32 %v562, %v942
    %v944 = vpop.f32.mrb[0].mxu0
    %945 = vmatprep.mubr.f32.mxu0 0.0
    %v946 = vand.u32 %v320, 4294901760
    %947 = vmatmul.mubr.f32.gmra.mrb[0].mxu0 %v946
    %v948 = vpop.f32.mrb[0].mxu0
    %v949 = vadd.f32 %v572, %v948
    %v950 = vpop.f32.mrb[0].mxu0
    %951 = vmatprep.mubr.f32.mxu0 0.0
    %v952 = vand.u32 %v323, 4294901760
    %953 = vmatmul.mubr.f32.gmra.mrb[0].mxu0 %v952
    %v954 = vpop.f32.mrb[0].mxu0
    %v955 = vadd.f32 %v582, %v954
    %v956 = vpop.f32.mrb[0].mxu0
    %957 = vmatprep.mubr.f32.mxu0 0.0
    %v958 = vand.u32 %v326, 4294901760
    %959 = vmatmul.mubr.f32.gmra.mrb[0].mxu0 %v958
    %v960 = vpop.f32.mrb[0].mxu0
    %v961 = vadd.f32 %v592, %v960
    %v962 = vpop.f32.mrb[0].mxu0
    %963 = vmatprep.mubr.f32.mxu0 0.0
    %v964 = vand.u32 %v329, 4294901760
    %965 = vmatmul.mubr.f32.gmra.mrb[0].mxu0 %v964
    %v966 = vpop.f32.mrb[0].mxu0
    %v967 = vadd.f32 %v602, %v966
    %v968 = vpop.f32.mrb[0].mxu0
    %969 = vmatprep.mubr.f32.mxu0 0.0
    %v970 = vand.u32 %v332, 4294901760
    %971 = vmatmul.mubr.f32.gmra.mrb[0].mxu0 %v970
    %v972 = vpop.f32.mrb[0].mxu0
    %v973 = vadd.f32 %v612, %v972
    %v974 = vpop.f32.mrb[0].mxu0
    %975 = vmatprep.mubr.f32.mxu0 0.0
    %v976 = vand.u32 %v335, 4294901760
    %977 = vmatmul.mubr.f32.gmra.mrb[0].mxu0 %v976
    %v978 = vpop.f32.mrb[0].mxu0
    %v979 = vadd.f32 %v622, %v978
    %v980 = vpop.f32.mrb[0].mxu0
    %981 = vmatprep.mubr.f32.mxu0 0.0
    %v982 = vand.u32 %v338, 4294901760
    %983 = vmatmul.mubr.f32.gmra.mrb[0].mxu0 %v982
    %v984 = vpop.f32.mrb[0].mxu0
    %v985 = vadd.f32 %v632, %v984
    %v986 = vpop.f32.mrb[0].mxu0
    %987 = vmatprep.mubr.f32.mxu0 0.0
    %v988 = vand.u32 %v341, 4294901760
    %989 = vmatmul.mubr.f32.gmra.mrb[0].mxu0 %v988
    %v990 = vpop.f32.mrb[0].mxu0
    %v991 = vadd.f32 %v642, %v990
    %v992 = vpop.f32.mrb[0].mxu0
    %993 = vmatprep.mubr.f32.mxu0 0.0
    %v994 = vand.u32 %v344, 4294901760
    %995 = vmatmul.mubr.f32.gmra.mrb[0].mxu0 %v994
    %v996 = vpop.f32.mrb[0].mxu0
    %v997 = vadd.f32 %v652, %v996
    %v998 = vpop.f32.mrb[0].mxu0
    %999 = vmatprep.mubr.f32.mxu0 0.0
    %v1000 = vand.u32 %v347, 4294901760
    %1001 = vmatmul.mubr.f32.gmra.mrb[0].mxu0 %v1000
    %v1002 = vpop.f32.mrb[0].mxu0
    %v1003 = vadd.f32 %v662, %v1002
    %v1004 = vpop.f32.mrb[0].mxu0
    %1005 = vmatprep.mubr.f32.mxu0 0.0
    %v1006 = vand.u32 %v350, 4294901760
    %1007 = vmatmul.mubr.f32.gmra.mrb[0].mxu0 %v1006
    %v1008 = vpop.f32.mrb[0].mxu0
    %v1009 = vadd.f32 %v672, %v1008
    %v1010 = vpop.f32.mrb[0].mxu0
    %1011 = vmatprep.mubr.f32.mxu0 0.0
    %v1012 = vand.u32 %v353, 4294901760
    %1013 = vmatmul.mubr.f32.gmra.mrb[0].mxu0 %v1012
    %v1014 = vpop.f32.mrb[0].mxu0
    %v1015 = vadd.f32 %v682, %v1014
    %v1016 = vpop.f32.mrb[0].mxu0
    %1017 = vmatprep.mubr.f32.mxu0 0.0
    %v1018 = vand.u32 %v356, 4294901760
    %1019 = vmatmul.mubr.f32.gmra.mrb[0].mxu0 %v1018
    %v1020 = vpop.f32.mrb[0].mxu0
    %v1021 = vadd.f32 %v692, %v1020
    %v1022 = vpop.f32.mrb[0].mxu0
    %1023 = vmatprep.mubr.f32.mxu0 0.0
    %v1024 = vand.u32 %v359, 4294901760
    %1025 = vmatmul.mubr.f32.gmra.mrb[0].mxu0 %v1024
    %v1026 = vpop.f32.mrb[0].mxu0
    %v1027 = vadd.f32 %v702, %v1026
    %v1028 = vpop.f32.mrb[0].mxu0
    %1029 = vmatprep.mubr.f32.mxu0 0.0
    %v1030 = vand.u32 %v362, 4294901760
    %1031 = vmatmul.mubr.f32.gmra.mrb[0].mxu0 %v1030
    %v1032 = vpop.f32.mrb[0].mxu0
    %v1033 = vadd.f32 %v712, %v1032
    %v1034 = vpop.f32.mrb[0].mxu0
    %1035 = vmatprep.mubr.f32.mxu0 0.0
    %v1036 = vand.u32 %v365, 4294901760
    %1037 = vmatmul.mubr.f32.gmra.mrb[0].mxu0 %v1036
    %v1038 = vpop.f32.mrb[0].mxu0
    %v1039 = vadd.f32 %v722, %v1038
    %v1040 = vpop.f32.mrb[0].mxu0
    %1041 = vmatprep.mubr.f32.mxu0 0.0
    %v1042 = vand.u32 %v368, 4294901760
    %1043 = vmatmul.mubr.f32.gmra.mrb[0].mxu0 %v1042
    %v1044 = vpop.f32.mrb[0].mxu0
    %v1045 = vadd.f32 %v732, %v1044
    %v1046 = vpop.f32.mrb[0].mxu0
    %1047 = vmatprep.mubr.f32.mxu0 0.0
    %v1048 = vand.u32 %v371, 4294901760
    %1049 = vmatmul.mubr.f32.gmra.mrb[0].mxu0 %v1048
    %v1050 = vpop.f32.mrb[0].mxu0
    %v1051 = vadd.f32 %v742, %v1050
    %v1052 = vpop.f32.mrb[0].mxu0
    %1053 = vmatprep.mubr.f32.mxu0 0.0
    %v1054 = vand.u32 %v374, 4294901760
    %1055 = vmatmul.mubr.f32.gmra.mrb[0].mxu0 %v1054
    %v1056 = vpop.f32.mrb[0].mxu0
    %v1057 = vadd.f32 %v752, %v1056
    %v1058 = vpop.f32.mrb[0].mxu0
    %1059 = vmatprep.mubr.f32.mxu0 0.0
    %v1060 = vand.u32 %v377, 4294901760
    %1061 = vmatmul.mubr.f32.gmra.mrb[0].mxu0 %v1060
    %v1062 = vpop.f32.mrb[0].mxu0
    %v1063 = vadd.f32 %v762, %v1062
    %v1064 = vpop.f32.mrb[0].mxu0
    %1065 = vmatprep.mubr.f32.mxu0 0.0
    %v1066 = vand.u32 %v380, 4294901760
    %1067 = vmatmul.mubr.f32.gmra.mrb[0].mxu0 %v1066
    %v1068 = vpop.f32.mrb[0].mxu0
    %v1069 = vadd.f32 %v772, %v1068
    %v1070 = vpop.f32.mrb[0].mxu0
    %1071 = vdwg.mxu0
    %1072 = vmatprep.subr.mxu0 0.0
    %v1073 = vand.u32 %v277, 4294901760
    %v1074 = vsub.f32 %v277, %v1073
    %1075 = vmatpush1.msra.mxu0 %v1074
    %1076 = vmatprep.subr.mxu0 0.0
    %v1077 = vand.u32 %v278, 4294901760
    %v1078 = vsub.f32 %v278, %v1077
    %1079 = vmatpush1.msra.mxu0 %v1078
    %1080 = vmatprep.subr.mxu0 0.0
    %v1081 = vand.u32 %v279, 4294901760
    %v1082 = vsub.f32 %v279, %v1081
    %1083 = vmatpush1.msra.mxu0 %v1082
    %1084 = vmatprep.subr.mxu0 0.0
    %v1085 = vand.u32 %v280, 4294901760
    %v1086 = vsub.f32 %v280, %v1085
    %1087 = vmatpush1.msra.mxu0 %v1086
    %1088 = vmatprep.subr.mxu0 0.0
    %v1089 = vand.u32 %v281, 4294901760
    %v1090 = vsub.f32 %v281, %v1089
    %1091 = vmatpush1.msra.mxu0 %v1090
    %1092 = vmatprep.subr.mxu0 0.0
    %v1093 = vand.u32 %v282, 4294901760
    %v1094 = vsub.f32 %v282, %v1093
    %1095 = vmatpush1.msra.mxu0 %v1094
    %1096 = vmatprep.subr.mxu0 0.0
    %v1097 = vand.u32 %v283, 4294901760
    %v1098 = vsub.f32 %v283, %v1097
    %1099 = vmatpush1.msra.mxu0 %v1098
    %1100 = vmatprep.subr.mxu0 0.0
    %v1101 = vand.u32 %v284, 4294901760
    %v1102 = vsub.f32 %v284, %v1101
    %1103 = vmatpush1.msra.mxu0 %v1102
    %1104 = vmatprep.subr.mxu0 0.0
    %1105 = vmatpush1.msra.mxu0 0.0
    %1106 = vmatprep.subr.mxu0 0.0
    %1107 = vmatpush1.msra.mxu0 0.0
    %1108 = vmatprep.subr.mxu0 0.0
    %1109 = vmatpush1.msra.mxu0 0.0
    %1110 = vmatprep.subr.mxu0 0.0
    %1111 = vmatpush1.msra.mxu0 0.0
    %1112 = vmatprep.subr.mxu0 0.0
    %1113 = vmatpush1.msra.mxu0 0.0
    %1114 = vmatprep.subr.mxu0 0.0
    %1115 = vmatpush1.msra.mxu0 0.0
    %1116 = vmatprep.subr.mxu0 0.0
    %1117 = vmatpush1.msra.mxu0 0.0
    %1118 = vmatprep.subr.mxu0 0.0
    %1119 = vmatpush1.msra.mxu0 0.0
    %1120 = vmatprep.subr.mxu0 0.0
    %1121 = vmatpush1.msra.mxu0 0.0
    %1122 = vmatprep.subr.mxu0 0.0
    %1123 = vmatpush1.msra.mxu0 0.0
    %1124 = vmatprep.subr.mxu0 0.0
    %1125 = vmatpush1.msra.mxu0 0.0
    %1126 = vmatprep.subr.mxu0 0.0
    %1127 = vmatpush1.msra.mxu0 0.0
    %1128 = vmatprep.subr.mxu0 0.0
    %1129 = vmatpush1.msra.mxu0 0.0
    %1130 = vmatprep.subr.mxu0 0.0
    %1131 = vmatpush1.msra.mxu0 0.0
    %1132 = vmatprep.subr.mxu0 0.0
    %1133 = vmatpush1.msra.mxu0 0.0
    %1134 = vmatprep.subr.mxu0 0.0
    %1135 = vmatpush1.msra.mxu0 0.0
    %1136 = vmatprep.subr.mxu0 0.0
    %1137 = vmatpush1.msra.mxu0 0.0
    %1138 = vmatprep.subr.mxu0 0.0
    %1139 = vmatpush1.msra.mxu0 0.0
    %1140 = vmatprep.subr.mxu0 0.0
    %1141 = vmatpush1.msra.mxu0 0.0
    %1142 = vmatprep.subr.mxu0 0.0
    %1143 = vmatpush1.msra.mxu0 0.0
    %1144 = vmatprep.subr.mxu0 0.0
    %1145 = vmatpush1.msra.mxu0 0.0
    %1146 = vmatprep.subr.mxu0 0.0
    %1147 = vmatpush1.msra.mxu0 0.0
    %1148 = vmatprep.subr.mxu0 0.0
    %1149 = vmatpush1.msra.mxu0 0.0
    %1150 = vmatprep.subr.mxu0 0.0
    %1151 = vmatpush1.msra.mxu0 0.0
    %1152 = vmatprep.mubr.f32.mxu0 0.0
    %v1153 = vand.u32 %v287, 4294901760
    %v1154 = vsub.f32 %v287, %v1153
    %1155 = vmatmul.mubr.f32.gmra.mrb[0].mxu0 %v1154
    %v1156 = vpop.f32.mrb[0].mxu0
    %v1157 = vadd.f32 %v883, %v1156
    %v1158 = vpop.f32.mrb[0].mxu0
    %1159 = vmatprep.mubr.f32.mxu0 0.0
    %v1160 = vand.u32 %v290, 4294901760
    %v1161 = vsub.f32 %v290, %v1160
    %1162 = vmatmul.mubr.f32.gmra.mrb[0].mxu0 %v1161
    %v1163 = vpop.f32.mrb[0].mxu0
    %v1164 = vadd.f32 %v889, %v1163
    %v1165 = vpop.f32.mrb[0].mxu0
    %1166 = vmatprep.mubr.f32.mxu0 0.0
    %v1167 = vand.u32 %v293, 4294901760
    %v1168 = vsub.f32 %v293, %v1167
    %1169 = vmatmul.mubr.f32.gmra.mrb[0].mxu0 %v1168
    %v1170 = vpop.f32.mrb[0].mxu0
    %v1171 = vadd.f32 %v895, %v1170
    %v1172 = vpop.f32.mrb[0].mxu0
    %1173 = vmatprep.mubr.f32.mxu0 0.0
    %v1174 = vand.u32 %v296, 4294901760
    %v1175 = vsub.f32 %v296, %v1174
    %1176 = vmatmul.mubr.f32.gmra.mrb[0].mxu0 %v1175
    %v1177 = vpop.f32.mrb[0].mxu0
    %v1178 = vadd.f32 %v901, %v1177
    %v1179 = vpop.f32.mrb[0].mxu0
    %1180 = vmatprep.mubr.f32.mxu0 0.0
    %v1181 = vand.u32 %v299, 4294901760
    %v1182 = vsub.f32 %v299, %v1181
    %1183 = vmatmul.mubr.f32.gmra.mrb[0].mxu0 %v1182
    %v1184 = vpop.f32.mrb[0].mxu0
    %v1185 = vadd.f32 %v907, %v1184
    %v1186 = vpop.f32.mrb[0].mxu0
    %1187 = vmatprep.mubr.f32.mxu0 0.0
    %v1188 = vand.u32 %v302, 4294901760
    %v1189 = vsub.f32 %v302, %v1188
    %1190 = vmatmul.mubr.f32.gmra.mrb[0].mxu0 %v1189
    %v1191 = vpop.f32.mrb[0].mxu0
    %v1192 = vadd.f32 %v913, %v1191
    %v1193 = vpop.f32.mrb[0].mxu0
    %1194 = vmatprep.mubr.f32.mxu0 0.0
    %v1195 = vand.u32 %v305, 4294901760
    %v1196 = vsub.f32 %v305, %v1195
    %1197 = vmatmul.mubr.f32.gmra.mrb[0].mxu0 %v1196
    %v1198 = vpop.f32.mrb[0].mxu0
    %v1199 = vadd.f32 %v919, %v1198
    %v1200 = vpop.f32.mrb[0].mxu0
    %1201 = vmatprep.mubr.f32.mxu0 0.0
    %v1202 = vand.u32 %v308, 4294901760
    %v1203 = vsub.f32 %v308, %v1202
    %1204 = vmatmul.mubr.f32.gmra.mrb[0].mxu0 %v1203
    %v1205 = vpop.f32.mrb[0].mxu0
    %v1206 = vadd.f32 %v925, %v1205
    %v1207 = vpop.f32.mrb[0].mxu0
    %1208 = vmatprep.mubr.f32.mxu0 0.0
    %v1209 = vand.u32 %v311, 4294901760
    %v1210 = vsub.f32 %v311, %v1209
    %1211 = vmatmul.mubr.f32.gmra.mrb[0].mxu0 %v1210
    %v1212 = vpop.f32.mrb[0].mxu0
    %v1213 = vadd.f32 %v931, %v1212
    %v1214 = vpop.f32.mrb[0].mxu0
    %1215 = vmatprep.mubr.f32.mxu0 0.0
    %v1216 = vand.u32 %v314, 4294901760
    %v1217 = vsub.f32 %v314, %v1216
    %1218 = vmatmul.mubr.f32.gmra.mrb[0].mxu0 %v1217
    %v1219 = vpop.f32.mrb[0].mxu0
    %v1220 = vadd.f32 %v937, %v1219
    %v1221 = vpop.f32.mrb[0].mxu0
    %1222 = vmatprep.mubr.f32.mxu0 0.0
    %v1223 = vand.u32 %v317, 4294901760
    %v1224 = vsub.f32 %v317, %v1223
    %1225 = vmatmul.mubr.f32.gmra.mrb[0].mxu0 %v1224
    %v1226 = vpop.f32.mrb[0].mxu0
    %v1227 = vadd.f32 %v943, %v1226
    %v1228 = vpop.f32.mrb[0].mxu0
    %1229 = vmatprep.mubr.f32.mxu0 0.0
    %v1230 = vand.u32 %v320, 4294901760
    %v1231 = vsub.f32 %v320, %v1230
    %1232 = vmatmul.mubr.f32.gmra.mrb[0].mxu0 %v1231
    %v1233 = vpop.f32.mrb[0].mxu0
    %v1234 = vadd.f32 %v949, %v1233
    %v1235 = vpop.f32.mrb[0].mxu0
    %1236 = vmatprep.mubr.f32.mxu0 0.0
    %v1237 = vand.u32 %v323, 4294901760
    %v1238 = vsub.f32 %v323, %v1237
    %1239 = vmatmul.mubr.f32.gmra.mrb[0].mxu0 %v1238
    %v1240 = vpop.f32.mrb[0].mxu0
    %v1241 = vadd.f32 %v955, %v1240
    %v1242 = vpop.f32.mrb[0].mxu0
    %1243 = vmatprep.mubr.f32.mxu0 0.0
    %v1244 = vand.u32 %v326, 4294901760
    %v1245 = vsub.f32 %v326, %v1244
    %1246 = vmatmul.mubr.f32.gmra.mrb[0].mxu0 %v1245
    %v1247 = vpop.f32.mrb[0].mxu0
    %v1248 = vadd.f32 %v961, %v1247
    %v1249 = vpop.f32.mrb[0].mxu0
    %1250 = vmatprep.mubr.f32.mxu0 0.0
    %v1251 = vand.u32 %v329, 4294901760
    %v1252 = vsub.f32 %v329, %v1251
    %1253 = vmatmul.mubr.f32.gmra.mrb[0].mxu0 %v1252
    %v1254 = vpop.f32.mrb[0].mxu0
    %v1255 = vadd.f32 %v967, %v1254
    %v1256 = vpop.f32.mrb[0].mxu0
    %1257 = vmatprep.mubr.f32.mxu0 0.0
    %v1258 = vand.u32 %v332, 4294901760
    %v1259 = vsub.f32 %v332, %v1258
    %1260 = vmatmul.mubr.f32.gmra.mrb[0].mxu0 %v1259
    %v1261 = vpop.f32.mrb[0].mxu0
    %v1262 = vadd.f32 %v973, %v1261
    %v1263 = vpop.f32.mrb[0].mxu0
    %1264 = vmatprep.mubr.f32.mxu0 0.0
    %v1265 = vand.u32 %v335, 4294901760
    %v1266 = vsub.f32 %v335, %v1265
    %1267 = vmatmul.mubr.f32.gmra.mrb[0].mxu0 %v1266
    %v1268 = vpop.f32.mrb[0].mxu0
    %v1269 = vadd.f32 %v979, %v1268
    %v1270 = vpop.f32.mrb[0].mxu0
    %1271 = vmatprep.mubr.f32.mxu0 0.0
    %v1272 = vand.u32 %v338, 4294901760
    %v1273 = vsub.f32 %v338, %v1272
    %1274 = vmatmul.mubr.f32.gmra.mrb[0].mxu0 %v1273
    %v1275 = vpop.f32.mrb[0].mxu0
    %v1276 = vadd.f32 %v985, %v1275
    %v1277 = vpop.f32.mrb[0].mxu0
    %1278 = vmatprep.mubr.f32.mxu0 0.0
    %v1279 = vand.u32 %v341, 4294901760
    %v1280 = vsub.f32 %v341, %v1279
    %1281 = vmatmul.mubr.f32.gmra.mrb[0].mxu0 %v1280
    %v1282 = vpop.f32.mrb[0].mxu0
    %v1283 = vadd.f32 %v991, %v1282
    %v1284 = vpop.f32.mrb[0].mxu0
    %1285 = vmatprep.mubr.f32.mxu0 0.0
    %v1286 = vand.u32 %v344, 4294901760
    %v1287 = vsub.f32 %v344, %v1286
    %1288 = vmatmul.mubr.f32.gmra.mrb[0].mxu0 %v1287
    %v1289 = vpop.f32.mrb[0].mxu0
    %v1290 = vadd.f32 %v997, %v1289
    %v1291 = vpop.f32.mrb[0].mxu0
    %1292 = vmatprep.mubr.f32.mxu0 0.0
    %v1293 = vand.u32 %v347, 4294901760
    %v1294 = vsub.f32 %v347, %v1293
    %1295 = vmatmul.mubr.f32.gmra.mrb[0].mxu0 %v1294
    %v1296 = vpop.f32.mrb[0].mxu0
    %v1297 = vadd.f32 %v1003, %v1296
    %v1298 = vpop.f32.mrb[0].mxu0
    %1299 = vmatprep.mubr.f32.mxu0 0.0
    %v1300 = vand.u32 %v350, 4294901760
    %v1301 = vsub.f32 %v350, %v1300
    %1302 = vmatmul.mubr.f32.gmra.mrb[0].mxu0 %v1301
    %v1303 = vpop.f32.mrb[0].mxu0
    %v1304 = vadd.f32 %v1009, %v1303
    %v1305 = vpop.f32.mrb[0].mxu0
    %1306 = vmatprep.mubr.f32.mxu0 0.0
    %v1307 = vand.u32 %v353, 4294901760
    %v1308 = vsub.f32 %v353, %v1307
    %1309 = vmatmul.mubr.f32.gmra.mrb[0].mxu0 %v1308
    %v1310 = vpop.f32.mrb[0].mxu0
    %v1311 = vadd.f32 %v1015, %v1310
    %v1312 = vpop.f32.mrb[0].mxu0
    %1313 = vmatprep.mubr.f32.mxu0 0.0
    %v1314 = vand.u32 %v356, 4294901760
    %v1315 = vsub.f32 %v356, %v1314
    %1316 = vmatmul.mubr.f32.gmra.mrb[0].mxu0 %v1315
    %v1317 = vpop.f32.mrb[0].mxu0
    %v1318 = vadd.f32 %v1021, %v1317
    %v1319 = vpop.f32.mrb[0].mxu0
    %1320 = vmatprep.mubr.f32.mxu0 0.0
    %v1321 = vand.u32 %v359, 4294901760
    %v1322 = vsub.f32 %v359, %v1321
    %1323 = vmatmul.mubr.f32.gmra.mrb[0].mxu0 %v1322
    %v1324 = vpop.f32.mrb[0].mxu0
    %v1325 = vadd.f32 %v1027, %v1324
    %v1326 = vpop.f32.mrb[0].mxu0
    %1327 = vmatprep.mubr.f32.mxu0 0.0
    %v1328 = vand.u32 %v362, 4294901760
    %v1329 = vsub.f32 %v362, %v1328
    %1330 = vmatmul.mubr.f32.gmra.mrb[0].mxu0 %v1329
    %v1331 = vpop.f32.mrb[0].mxu0
    %v1332 = vadd.f32 %v1033, %v1331
    %v1333 = vpop.f32.mrb[0].mxu0
    %1334 = vmatprep.mubr.f32.mxu0 0.0
    %v1335 = vand.u32 %v365, 4294901760
    %v1336 = vsub.f32 %v365, %v1335
    %1337 = vmatmul.mubr.f32.gmra.mrb[0].mxu0 %v1336
    %v1338 = vpop.f32.mrb[0].mxu0
    %v1339 = vadd.f32 %v1039, %v1338
    %v1340 = vpop.f32.mrb[0].mxu0
    %1341 = vmatprep.mubr.f32.mxu0 0.0
    %v1342 = vand.u32 %v368, 4294901760
    %v1343 = vsub.f32 %v368, %v1342
    %1344 = vmatmul.mubr.f32.gmra.mrb[0].mxu0 %v1343
    %v1345 = vpop.f32.mrb[0].mxu0
    %v1346 = vadd.f32 %v1045, %v1345
    %v1347 = vpop.f32.mrb[0].mxu0
    %1348 = vmatprep.mubr.f32.mxu0 0.0
    %v1349 = vand.u32 %v371, 4294901760
    %v1350 = vsub.f32 %v371, %v1349
    %1351 = vmatmul.mubr.f32.gmra.mrb[0].mxu0 %v1350
    %v1352 = vpop.f32.mrb[0].mxu0
    %v1353 = vadd.f32 %v1051, %v1352
    %v1354 = vpop.f32.mrb[0].mxu0
    %1355 = vmatprep.mubr.f32.mxu0 0.0
    %v1356 = vand.u32 %v374, 4294901760
    %v1357 = vsub.f32 %v374, %v1356
    %1358 = vmatmul.mubr.f32.gmra.mrb[0].mxu0 %v1357
    %v1359 = vpop.f32.mrb[0].mxu0
    %v1360 = vadd.f32 %v1057, %v1359
    %v1361 = vpop.f32.mrb[0].mxu0
    %1362 = vmatprep.mubr.f32.mxu0 0.0
    %v1363 = vand.u32 %v377, 4294901760
    %v1364 = vsub.f32 %v377, %v1363
    %1365 = vmatmul.mubr.f32.gmra.mrb[0].mxu0 %v1364
    %v1366 = vpop.f32.mrb[0].mxu0
    %v1367 = vadd.f32 %v1063, %v1366
    %v1368 = vpop.f32.mrb[0].mxu0
    %1369 = vmatprep.mubr.f32.mxu0 0.0
    %v1370 = vand.u32 %v380, 4294901760
    %v1371 = vsub.f32 %v380, %v1370
    %1372 = vmatmul.mubr.f32.gmra.mrb[0].mxu0 %v1371
    %v1373 = vpop.f32.mrb[0].mxu0
    %v1374 = vadd.f32 %v1069, %v1373
    %v1375 = vpop.f32.mrb[0].mxu0
    %1376 = vdwg.mxu0
    %1377 = vmatprep.subr.mxu0 0.0
    %v1378 = vand.u32 %v277, 4294901760
    %1379 = vmatpush1.msra.mxu0 %v1378
    %1380 = vmatprep.subr.mxu0 0.0
    %v1381 = vand.u32 %v278, 4294901760
    %1382 = vmatpush1.msra.mxu0 %v1381
    %1383 = vmatprep.subr.mxu0 0.0
    %v1384 = vand.u32 %v279, 4294901760
    %1385 = vmatpush1.msra.mxu0 %v1384
    %1386 = vmatprep.subr.mxu0 0.0
    %v1387 = vand.u32 %v280, 4294901760
    %1388 = vmatpush1.msra.mxu0 %v1387
    %1389 = vmatprep.subr.mxu0 0.0
    %v1390 = vand.u32 %v281, 4294901760
    %1391 = vmatpush1.msra.mxu0 %v1390
    %1392 = vmatprep.subr.mxu0 0.0
    %v1393 = vand.u32 %v282, 4294901760
    %1394 = vmatpush1.msra.mxu0 %v1393
    %1395 = vmatprep.subr.mxu0 0.0
    %v1396 = vand.u32 %v283, 4294901760
    %1397 = vmatpush1.msra.mxu0 %v1396
    %1398 = vmatprep.subr.mxu0 0.0
    %v1399 = vand.u32 %v284, 4294901760
    %1400 = vmatpush1.msra.mxu0 %v1399
    %1401 = vmatprep.subr.mxu0 0.0
    %1402 = vmatpush1.msra.mxu0 0.0
    %1403 = vmatprep.subr.mxu0 0.0
    %1404 = vmatpush1.msra.mxu0 0.0
    %1405 = vmatprep.subr.mxu0 0.0
    %1406 = vmatpush1.msra.mxu0 0.0
    %1407 = vmatprep.subr.mxu0 0.0
    %1408 = vmatpush1.msra.mxu0 0.0
    %1409 = vmatprep.subr.mxu0 0.0
    %1410 = vmatpush1.msra.mxu0 0.0
    %1411 = vmatprep.subr.mxu0 0.0
    %1412 = vmatpush1.msra.mxu0 0.0
    %1413 = vmatprep.subr.mxu0 0.0
    %1414 = vmatpush1.msra.mxu0 0.0
    %1415 = vmatprep.subr.mxu0 0.0
    %1416 = vmatpush1.msra.mxu0 0.0
    %1417 = vmatprep.subr.mxu0 0.0
    %1418 = vmatpush1.msra.mxu0 0.0
    %1419 = vmatprep.subr.mxu0 0.0
    %1420 = vmatpush1.msra.mxu0 0.0
    %1421 = vmatprep.subr.mxu0 0.0
    %1422 = vmatpush1.msra.mxu0 0.0
    %1423 = vmatprep.subr.mxu0 0.0
    %1424 = vmatpush1.msra.mxu0 0.0
    %1425 = vmatprep.subr.mxu0 0.0
    %1426 = vmatpush1.msra.mxu0 0.0
    %1427 = vmatprep.subr.mxu0 0.0
    %1428 = vmatpush1.msra.mxu0 0.0
    %1429 = vmatprep.subr.mxu0 0.0
    %1430 = vmatpush1.msra.mxu0 0.0
    %1431 = vmatprep.subr.mxu0 0.0
    %1432 = vmatpush1.msra.mxu0 0.0
    %1433 = vmatprep.subr.mxu0 0.0
    %1434 = vmatpush1.msra.mxu0 0.0
    %1435 = vmatprep.subr.mxu0 0.0
    %1436 = vmatpush1.msra.mxu0 0.0
    %1437 = vmatprep.subr.mxu0 0.0
    %1438 = vmatpush1.msra.mxu0 0.0
    %1439 = vmatprep.subr.mxu0 0.0
    %1440 = vmatpush1.msra.mxu0 0.0
    %1441 = vmatprep.subr.mxu0 0.0
    %1442 = vmatpush1.msra.mxu0 0.0
    %1443 = vmatprep.subr.mxu0 0.0
    %1444 = vmatpush1.msra.mxu0 0.0
    %1445 = vmatprep.subr.mxu0 0.0
    %1446 = vmatpush1.msra.mxu0 0.0
    %1447 = vmatprep.subr.mxu0 0.0
    %1448 = vmatpush1.msra.mxu0 0.0
    %1449 = vmatprep.mubr.f32.mxu0 0.0
    %v1450 = vand.u32 %v287, 4294901760
    %v1451 = vsub.f32 %v287, %v1450
    %v1452 = vand.u32 %v1451, 4294901760
    %1453 = vmatmul.mubr.f32.gmra.mrb[0].mxu0 %v1452
    %v1454 = vpop.f32.mrb[0].mxu0
    %v1455 = vadd.f32 %v1157, %v1454
    %v1456 = vpop.f32.mrb[0].mxu0
    %1457 = vmatprep.mubr.f32.mxu0 0.0
    %v1458 = vand.u32 %v290, 4294901760
    %v1459 = vsub.f32 %v290, %v1458
    %v1460 = vand.u32 %v1459, 4294901760
    %1461 = vmatmul.mubr.f32.gmra.mrb[0].mxu0 %v1460
    %v1462 = vpop.f32.mrb[0].mxu0
    %v1463 = vadd.f32 %v1164, %v1462
    %v1464 = vpop.f32.mrb[0].mxu0
    %1465 = vmatprep.mubr.f32.mxu0 0.0
    %v1466 = vand.u32 %v293, 4294901760
    %v1467 = vsub.f32 %v293, %v1466
    %v1468 = vand.u32 %v1467, 4294901760
    %1469 = vmatmul.mubr.f32.gmra.mrb[0].mxu0 %v1468
    %v1470 = vpop.f32.mrb[0].mxu0
    %v1471 = vadd.f32 %v1171, %v1470
    %v1472 = vpop.f32.mrb[0].mxu0
    %1473 = vmatprep.mubr.f32.mxu0 0.0
    %v1474 = vand.u32 %v296, 4294901760
    %v1475 = vsub.f32 %v296, %v1474
    %v1476 = vand.u32 %v1475, 4294901760
    %1477 = vmatmul.mubr.f32.gmra.mrb[0].mxu0 %v1476
    %v1478 = vpop.f32.mrb[0].mxu0
    %v1479 = vadd.f32 %v1178, %v1478
    %v1480 = vpop.f32.mrb[0].mxu0
    %1481 = vmatprep.mubr.f32.mxu0 0.0
    %v1482 = vand.u32 %v299, 4294901760
    %v1483 = vsub.f32 %v299, %v1482
    %v1484 = vand.u32 %v1483, 4294901760
    %1485 = vmatmul.mubr.f32.gmra.mrb[0].mxu0 %v1484
    %v1486 = vpop.f32.mrb[0].mxu0
    %v1487 = vadd.f32 %v1185, %v1486
    %v1488 = vpop.f32.mrb[0].mxu0
    %1489 = vmatprep.mubr.f32.mxu0 0.0
    %v1490 = vand.u32 %v302, 4294901760
    %v1491 = vsub.f32 %v302, %v1490
    %v1492 = vand.u32 %v1491, 4294901760
    %1493 = vmatmul.mubr.f32.gmra.mrb[0].mxu0 %v1492
    %v1494 = vpop.f32.mrb[0].mxu0
    %v1495 = vadd.f32 %v1192, %v1494
    %v1496 = vpop.f32.mrb[0].mxu0
    %1497 = vmatprep.mubr.f32.mxu0 0.0
    %v1498 = vand.u32 %v305, 4294901760
    %v1499 = vsub.f32 %v305, %v1498
    %v1500 = vand.u32 %v1499, 4294901760
    %1501 = vmatmul.mubr.f32.gmra.mrb[0].mxu0 %v1500
    %v1502 = vpop.f32.mrb[0].mxu0
    %v1503 = vadd.f32 %v1199, %v1502
    %v1504 = vpop.f32.mrb[0].mxu0
    %1505 = vmatprep.mubr.f32.mxu0 0.0
    %v1506 = vand.u32 %v308, 4294901760
    %v1507 = vsub.f32 %v308, %v1506
    %v1508 = vand.u32 %v1507, 4294901760
    %1509 = vmatmul.mubr.f32.gmra.mrb[0].mxu0 %v1508
    %v1510 = vpop.f32.mrb[0].mxu0
    %v1511 = vadd.f32 %v1206, %v1510
    %v1512 = vpop.f32.mrb[0].mxu0
    %1513 = vmatprep.mubr.f32.mxu0 0.0
    %v1514 = vand.u32 %v311, 4294901760
    %v1515 = vsub.f32 %v311, %v1514
    %v1516 = vand.u32 %v1515, 4294901760
    %1517 = vmatmul.mubr.f32.gmra.mrb[0].mxu0 %v1516
    %v1518 = vpop.f32.mrb[0].mxu0
    %v1519 = vadd.f32 %v1213, %v1518
    %v1520 = vpop.f32.mrb[0].mxu0
    %1521 = vmatprep.mubr.f32.mxu0 0.0
    %v1522 = vand.u32 %v314, 4294901760
    %v1523 = vsub.f32 %v314, %v1522
    %v1524 = vand.u32 %v1523, 4294901760
    %1525 = vmatmul.mubr.f32.gmra.mrb[0].mxu0 %v1524
    %v1526 = vpop.f32.mrb[0].mxu0
    %v1527 = vadd.f32 %v1220, %v1526
    %v1528 = vpop.f32.mrb[0].mxu0
    %1529 = vmatprep.mubr.f32.mxu0 0.0
    %v1530 = vand.u32 %v317, 4294901760
    %v1531 = vsub.f32 %v317, %v1530
    %v1532 = vand.u32 %v1531, 4294901760
    %1533 = vmatmul.mubr.f32.gmra.mrb[0].mxu0 %v1532
    %v1534 = vpop.f32.mrb[0].mxu0
    %v1535 = vadd.f32 %v1227, %v1534
    %v1536 = vpop.f32.mrb[0].mxu0
    %1537 = vmatprep.mubr.f32.mxu0 0.0
    %v1538 = vand.u32 %v320, 4294901760
    %v1539 = vsub.f32 %v320, %v1538
    %v1540 = vand.u32 %v1539, 4294901760
    %1541 = vmatmul.mubr.f32.gmra.mrb[0].mxu0 %v1540
    %v1542 = vpop.f32.mrb[0].mxu0
    %v1543 = vadd.f32 %v1234, %v1542
    %v1544 = vpop.f32.mrb[0].mxu0
    %1545 = vmatprep.mubr.f32.mxu0 0.0
    %v1546 = vand.u32 %v323, 4294901760
    %v1547 = vsub.f32 %v323, %v1546
    %v1548 = vand.u32 %v1547, 4294901760
    %1549 = vmatmul.mubr.f32.gmra.mrb[0].mxu0 %v1548
    %v1550 = vpop.f32.mrb[0].mxu0
    %v1551 = vadd.f32 %v1241, %v1550
    %v1552 = vpop.f32.mrb[0].mxu0
    %1553 = vmatprep.mubr.f32.mxu0 0.0
    %v1554 = vand.u32 %v326, 4294901760
    %v1555 = vsub.f32 %v326, %v1554
    %v1556 = vand.u32 %v1555, 4294901760
    %1557 = vmatmul.mubr.f32.gmra.mrb[0].mxu0 %v1556
    %v1558 = vpop.f32.mrb[0].mxu0
    %v1559 = vadd.f32 %v1248, %v1558
    %v1560 = vpop.f32.mrb[0].mxu0
    %1561 = vmatprep.mubr.f32.mxu0 0.0
    %v1562 = vand.u32 %v329, 4294901760
    %v1563 = vsub.f32 %v329, %v1562
    %v1564 = vand.u32 %v1563, 4294901760
    %1565 = vmatmul.mubr.f32.gmra.mrb[0].mxu0 %v1564
    %v1566 = vpop.f32.mrb[0].mxu0
    %v1567 = vadd.f32 %v1255, %v1566
    %v1568 = vpop.f32.mrb[0].mxu0
    %1569 = vmatprep.mubr.f32.mxu0 0.0
    %v1570 = vand.u32 %v332, 4294901760
    %v1571 = vsub.f32 %v332, %v1570
    %v1572 = vand.u32 %v1571, 4294901760
    %1573 = vmatmul.mubr.f32.gmra.mrb[0].mxu0 %v1572
    %v1574 = vpop.f32.mrb[0].mxu0
    %v1575 = vadd.f32 %v1262, %v1574
    %v1576 = vpop.f32.mrb[0].mxu0
    %1577 = vmatprep.mubr.f32.mxu0 0.0
    %v1578 = vand.u32 %v335, 4294901760
    %v1579 = vsub.f32 %v335, %v1578
    %v1580 = vand.u32 %v1579, 4294901760
    %1581 = vmatmul.mubr.f32.gmra.mrb[0].mxu0 %v1580
    %v1582 = vpop.f32.mrb[0].mxu0
    %v1583 = vadd.f32 %v1269, %v1582
    %v1584 = vpop.f32.mrb[0].mxu0
    %1585 = vmatprep.mubr.f32.mxu0 0.0
    %v1586 = vand.u32 %v338, 4294901760
    %v1587 = vsub.f32 %v338, %v1586
    %v1588 = vand.u32 %v1587, 4294901760
    %1589 = vmatmul.mubr.f32.gmra.mrb[0].mxu0 %v1588
    %v1590 = vpop.f32.mrb[0].mxu0
    %v1591 = vadd.f32 %v1276, %v1590
    %v1592 = vpop.f32.mrb[0].mxu0
    %1593 = vmatprep.mubr.f32.mxu0 0.0
    %v1594 = vand.u32 %v341, 4294901760
    %v1595 = vsub.f32 %v341, %v1594
    %v1596 = vand.u32 %v1595, 4294901760
    %1597 = vmatmul.mubr.f32.gmra.mrb[0].mxu0 %v1596
    %v1598 = vpop.f32.mrb[0].mxu0
    %v1599 = vadd.f32 %v1283, %v1598
    %v1600 = vpop.f32.mrb[0].mxu0
    %1601 = vmatprep.mubr.f32.mxu0 0.0
    %v1602 = vand.u32 %v344, 4294901760
    %v1603 = vsub.f32 %v344, %v1602
    %v1604 = vand.u32 %v1603, 4294901760
    %1605 = vmatmul.mubr.f32.gmra.mrb[0].mxu0 %v1604
    %v1606 = vpop.f32.mrb[0].mxu0
    %v1607 = vadd.f32 %v1290, %v1606
    %v1608 = vpop.f32.mrb[0].mxu0
    %1609 = vmatprep.mubr.f32.mxu0 0.0
    %v1610 = vand.u32 %v347, 4294901760
    %v1611 = vsub.f32 %v347, %v1610
    %v1612 = vand.u32 %v1611, 4294901760
    %1613 = vmatmul.mubr.f32.gmra.mrb[0].mxu0 %v1612
    %v1614 = vpop.f32.mrb[0].mxu0
    %v1615 = vadd.f32 %v1297, %v1614
    %v1616 = vpop.f32.mrb[0].mxu0
    %1617 = vmatprep.mubr.f32.mxu0 0.0
    %v1618 = vand.u32 %v350, 4294901760
    %v1619 = vsub.f32 %v350, %v1618
    %v1620 = vand.u32 %v1619, 4294901760
    %1621 = vmatmul.mubr.f32.gmra.mrb[0].mxu0 %v1620
    %v1622 = vpop.f32.mrb[0].mxu0
    %v1623 = vadd.f32 %v1304, %v1622
    %v1624 = vpop.f32.mrb[0].mxu0
    %1625 = vmatprep.mubr.f32.mxu0 0.0
    %v1626 = vand.u32 %v353, 4294901760
    %v1627 = vsub.f32 %v353, %v1626
    %v1628 = vand.u32 %v1627, 4294901760
    %1629 = vmatmul.mubr.f32.gmra.mrb[0].mxu0 %v1628
    %v1630 = vpop.f32.mrb[0].mxu0
    %v1631 = vadd.f32 %v1311, %v1630
    %v1632 = vpop.f32.mrb[0].mxu0
    %1633 = vmatprep.mubr.f32.mxu0 0.0
    %v1634 = vand.u32 %v356, 4294901760
    %v1635 = vsub.f32 %v356, %v1634
    %v1636 = vand.u32 %v1635, 4294901760
    %1637 = vmatmul.mubr.f32.gmra.mrb[0].mxu0 %v1636
    %v1638 = vpop.f32.mrb[0].mxu0
    %v1639 = vadd.f32 %v1318, %v1638
    %v1640 = vpop.f32.mrb[0].mxu0
    %1641 = vmatprep.mubr.f32.mxu0 0.0
    %v1642 = vand.u32 %v359, 4294901760
    %v1643 = vsub.f32 %v359, %v1642
    %v1644 = vand.u32 %v1643, 4294901760
    %1645 = vmatmul.mubr.f32.gmra.mrb[0].mxu0 %v1644
    %v1646 = vpop.f32.mrb[0].mxu0
    %v1647 = vadd.f32 %v1325, %v1646
    %v1648 = vpop.f32.mrb[0].mxu0
    %1649 = vmatprep.mubr.f32.mxu0 0.0
    %v1650 = vand.u32 %v362, 4294901760
    %v1651 = vsub.f32 %v362, %v1650
    %v1652 = vand.u32 %v1651, 4294901760
    %1653 = vmatmul.mubr.f32.gmra.mrb[0].mxu0 %v1652
    %v1654 = vpop.f32.mrb[0].mxu0
    %v1655 = vadd.f32 %v1332, %v1654
    %v1656 = vpop.f32.mrb[0].mxu0
    %1657 = vmatprep.mubr.f32.mxu0 0.0
    %v1658 = vand.u32 %v365, 4294901760
    %v1659 = vsub.f32 %v365, %v1658
    %v1660 = vand.u32 %v1659, 4294901760
    %1661 = vmatmul.mubr.f32.gmra.mrb[0].mxu0 %v1660
    %v1662 = vpop.f32.mrb[0].mxu0
    %v1663 = vadd.f32 %v1339, %v1662
    %v1664 = vpop.f32.mrb[0].mxu0
    %1665 = vmatprep.mubr.f32.mxu0 0.0
    %v1666 = vand.u32 %v368, 4294901760
    %v1667 = vsub.f32 %v368, %v1666
    %v1668 = vand.u32 %v1667, 4294901760
    %1669 = vmatmul.mubr.f32.gmra.mrb[0].mxu0 %v1668
    %v1670 = vpop.f32.mrb[0].mxu0
    %v1671 = vadd.f32 %v1346, %v1670
    %v1672 = vpop.f32.mrb[0].mxu0
    %1673 = vmatprep.mubr.f32.mxu0 0.0
    %v1674 = vand.u32 %v371, 4294901760
    %v1675 = vsub.f32 %v371, %v1674
    %v1676 = vand.u32 %v1675, 4294901760
    %1677 = vmatmul.mubr.f32.gmra.mrb[0].mxu0 %v1676
    %v1678 = vpop.f32.mrb[0].mxu0
    %v1679 = vadd.f32 %v1353, %v1678
    %v1680 = vpop.f32.mrb[0].mxu0
    %1681 = vmatprep.mubr.f32.mxu0 0.0
    %v1682 = vand.u32 %v374, 4294901760
    %v1683 = vsub.f32 %v374, %v1682
    %v1684 = vand.u32 %v1683, 4294901760
    %1685 = vmatmul.mubr.f32.gmra.mrb[0].mxu0 %v1684
    %v1686 = vpop.f32.mrb[0].mxu0
    %v1687 = vadd.f32 %v1360, %v1686
    %v1688 = vpop.f32.mrb[0].mxu0
    %1689 = vmatprep.mubr.f32.mxu0 0.0
    %v1690 = vand.u32 %v377, 4294901760
    %v1691 = vsub.f32 %v377, %v1690
    %v1692 = vand.u32 %v1691, 4294901760
    %1693 = vmatmul.mubr.f32.gmra.mrb[0].mxu0 %v1692
    %v1694 = vpop.f32.mrb[0].mxu0
    %v1695 = vadd.f32 %v1367, %v1694
    %v1696 = vpop.f32.mrb[0].mxu0
    %1697 = vmatprep.mubr.f32.mxu0 0.0
    %v1698 = vand.u32 %v380, 4294901760
    %v1699 = vsub.f32 %v380, %v1698
    %v1700 = vand.u32 %v1699, 4294901760
    %1701 = vmatmul.mubr.f32.gmra.mrb[0].mxu0 %v1700
    %v1702 = vpop.f32.mrb[0].mxu0
    %v1703 = vadd.f32 %v1374, %v1702
    %v1704 = vpop.f32.mrb[0].mxu0
    %1705 = vdwg.mxu0
    %1706 = vmatprep.subr.mxu0 0.0
    %v1707 = vand.u32 %v277, 4294901760
    %v1708 = vsub.f32 %v277, %v1707
    %v1709 = vand.u32 %v1708, 4294901760
    %1710 = vmatpush1.msra.mxu0 %v1709
    %1711 = vmatprep.subr.mxu0 0.0
    %v1712 = vand.u32 %v278, 4294901760
    %v1713 = vsub.f32 %v278, %v1712
    %v1714 = vand.u32 %v1713, 4294901760
    %1715 = vmatpush1.msra.mxu0 %v1714
    %1716 = vmatprep.subr.mxu0 0.0
    %v1717 = vand.u32 %v279, 4294901760
    %v1718 = vsub.f32 %v279, %v1717
    %v1719 = vand.u32 %v1718, 4294901760
    %1720 = vmatpush1.msra.mxu0 %v1719
    %1721 = vmatprep.subr.mxu0 0.0
    %v1722 = vand.u32 %v280, 4294901760
    %v1723 = vsub.f32 %v280, %v1722
    %v1724 = vand.u32 %v1723, 4294901760
    %1725 = vmatpush1.msra.mxu0 %v1724
    %1726 = vmatprep.subr.mxu0 0.0
    %v1727 = vand.u32 %v281, 4294901760
    %v1728 = vsub.f32 %v281, %v1727
    %v1729 = vand.u32 %v1728, 4294901760
    %1730 = vmatpush1.msra.mxu0 %v1729
    %1731 = vmatprep.subr.mxu0 0.0
    %v1732 = vand.u32 %v282, 4294901760
    %v1733 = vsub.f32 %v282, %v1732
    %v1734 = vand.u32 %v1733, 4294901760
    %1735 = vmatpush1.msra.mxu0 %v1734
    %1736 = vmatprep.subr.mxu0 0.0
    %v1737 = vand.u32 %v283, 4294901760
    %v1738 = vsub.f32 %v283, %v1737
    %v1739 = vand.u32 %v1738, 4294901760
    %1740 = vmatpush1.msra.mxu0 %v1739
    %1741 = vmatprep.subr.mxu0 0.0
    %v1742 = vand.u32 %v284, 4294901760
    %v1743 = vsub.f32 %v284, %v1742
    %v1744 = vand.u32 %v1743, 4294901760
    %1745 = vmatpush1.msra.mxu0 %v1744
    %1746 = vmatprep.subr.mxu0 0.0
    %1747 = vmatpush1.msra.mxu0 0.0
    %1748 = vmatprep.subr.mxu0 0.0
    %1749 = vmatpush1.msra.mxu0 0.0
    %1750 = vmatprep.subr.mxu0 0.0
    %1751 = vmatpush1.msra.mxu0 0.0
    %1752 = vmatprep.subr.mxu0 0.0
    %1753 = vmatpush1.msra.mxu0 0.0
    %1754 = vmatprep.subr.mxu0 0.0
    %1755 = vmatpush1.msra.mxu0 0.0
    %1756 = vmatprep.subr.mxu0 0.0
    %1757 = vmatpush1.msra.mxu0 0.0
    %1758 = vmatprep.subr.mxu0 0.0
    %1759 = vmatpush1.msra.mxu0 0.0
    %1760 = vmatprep.subr.mxu0 0.0
    %1761 = vmatpush1.msra.mxu0 0.0
    %1762 = vmatprep.subr.mxu0 0.0
    %1763 = vmatpush1.msra.mxu0 0.0
    %1764 = vmatprep.subr.mxu0 0.0
    %1765 = vmatpush1.msra.mxu0 0.0
    %1766 = vmatprep.subr.mxu0 0.0
    %1767 = vmatpush1.msra.mxu0 0.0
    %1768 = vmatprep.subr.mxu0 0.0
    %1769 = vmatpush1.msra.mxu0 0.0
    %1770 = vmatprep.subr.mxu0 0.0
    %1771 = vmatpush1.msra.mxu0 0.0
    %1772 = vmatprep.subr.mxu0 0.0
    %1773 = vmatpush1.msra.mxu0 0.0
    %1774 = vmatprep.subr.mxu0 0.0
    %1775 = vmatpush1.msra.mxu0 0.0
    %1776 = vmatprep.subr.mxu0 0.0
    %1777 = vmatpush1.msra.mxu0 0.0
    %1778 = vmatprep.subr.mxu0 0.0
    %1779 = vmatpush1.msra.mxu0 0.0
    %1780 = vmatprep.subr.mxu0 0.0
    %1781 = vmatpush1.msra.mxu0 0.0
    %1782 = vmatprep.subr.mxu0 0.0
    %1783 = vmatpush1.msra.mxu0 0.0
    %1784 = vmatprep.subr.mxu0 0.0
    %1785 = vmatpush1.msra.mxu0 0.0
    %1786 = vmatprep.subr.mxu0 0.0
    %1787 = vmatpush1.msra.mxu0 0.0
    %1788 = vmatprep.subr.mxu0 0.0
    %1789 = vmatpush1.msra.mxu0 0.0
    %1790 = vmatprep.subr.mxu0 0.0
    %1791 = vmatpush1.msra.mxu0 0.0
    %1792 = vmatprep.subr.mxu0 0.0
    %1793 = vmatpush1.msra.mxu0 0.0
    %1794 = vmatprep.mubr.f32.mxu0 0.0
    %v1795 = vand.u32 %v287, 4294901760
    %1796 = vmatmul.mubr.f32.gmra.mrb[0].mxu0 %v1795
    %v1797 = vpop.f32.mrb[0].mxu0
    %v1798 = vadd.f32 %v1455, %v1797
    %v1799 = vpop.f32.mrb[0].mxu0
    %1800 = vmatprep.mubr.f32.mxu0 0.0
    %v1801 = vand.u32 %v290, 4294901760
    %1802 = vmatmul.mubr.f32.gmra.mrb[0].mxu0 %v1801
    %v1803 = vpop.f32.mrb[0].mxu0
    %v1804 = vadd.f32 %v1463, %v1803
    %v1805 = vpop.f32.mrb[0].mxu0
    %1806 = vmatprep.mubr.f32.mxu0 0.0
    %v1807 = vand.u32 %v293, 4294901760
    %1808 = vmatmul.mubr.f32.gmra.mrb[0].mxu0 %v1807
    %v1809 = vpop.f32.mrb[0].mxu0
    %v1810 = vadd.f32 %v1471, %v1809
    %v1811 = vpop.f32.mrb[0].mxu0
    %1812 = vmatprep.mubr.f32.mxu0 0.0
    %v1813 = vand.u32 %v296, 4294901760
    %1814 = vmatmul.mubr.f32.gmra.mrb[0].mxu0 %v1813
    %v1815 = vpop.f32.mrb[0].mxu0
    %v1816 = vadd.f32 %v1479, %v1815
    %v1817 = vpop.f32.mrb[0].mxu0
    %1818 = vmatprep.mubr.f32.mxu0 0.0
    %v1819 = vand.u32 %v299, 4294901760
    %1820 = vmatmul.mubr.f32.gmra.mrb[0].mxu0 %v1819
    %v1821 = vpop.f32.mrb[0].mxu0
    %v1822 = vadd.f32 %v1487, %v1821
    %v1823 = vpop.f32.mrb[0].mxu0
    %1824 = vmatprep.mubr.f32.mxu0 0.0
    %v1825 = vand.u32 %v302, 4294901760
    %1826 = vmatmul.mubr.f32.gmra.mrb[0].mxu0 %v1825
    %v1827 = vpop.f32.mrb[0].mxu0
    %v1828 = vadd.f32 %v1495, %v1827
    %v1829 = vpop.f32.mrb[0].mxu0
    %1830 = vmatprep.mubr.f32.mxu0 0.0
    %v1831 = vand.u32 %v305, 4294901760
    %1832 = vmatmul.mubr.f32.gmra.mrb[0].mxu0 %v1831
    %v1833 = vpop.f32.mrb[0].mxu0
    %v1834 = vadd.f32 %v1503, %v1833
    %v1835 = vpop.f32.mrb[0].mxu0
    %1836 = vmatprep.mubr.f32.mxu0 0.0
    %v1837 = vand.u32 %v308, 4294901760
    %1838 = vmatmul.mubr.f32.gmra.mrb[0].mxu0 %v1837
    %v1839 = vpop.f32.mrb[0].mxu0
    %v1840 = vadd.f32 %v1511, %v1839
    %v1841 = vpop.f32.mrb[0].mxu0
    %1842 = vmatprep.mubr.f32.mxu0 0.0
    %v1843 = vand.u32 %v311, 4294901760
    %1844 = vmatmul.mubr.f32.gmra.mrb[0].mxu0 %v1843
    %v1845 = vpop.f32.mrb[0].mxu0
    %v1846 = vadd.f32 %v1519, %v1845
    %v1847 = vpop.f32.mrb[0].mxu0
    %1848 = vmatprep.mubr.f32.mxu0 0.0
    %v1849 = vand.u32 %v314, 4294901760
    %1850 = vmatmul.mubr.f32.gmra.mrb[0].mxu0 %v1849
    %v1851 = vpop.f32.mrb[0].mxu0
    %v1852 = vadd.f32 %v1527, %v1851
    %v1853 = vpop.f32.mrb[0].mxu0
    %1854 = vmatprep.mubr.f32.mxu0 0.0
    %v1855 = vand.u32 %v317, 4294901760
    %1856 = vmatmul.mubr.f32.gmra.mrb[0].mxu0 %v1855
    %v1857 = vpop.f32.mrb[0].mxu0
    %v1858 = vadd.f32 %v1535, %v1857
    %v1859 = vpop.f32.mrb[0].mxu0
    %1860 = vmatprep.mubr.f32.mxu0 0.0
    %v1861 = vand.u32 %v320, 4294901760
    %1862 = vmatmul.mubr.f32.gmra.mrb[0].mxu0 %v1861
    %v1863 = vpop.f32.mrb[0].mxu0
    %v1864 = vadd.f32 %v1543, %v1863
    %v1865 = vpop.f32.mrb[0].mxu0
    %1866 = vmatprep.mubr.f32.mxu0 0.0
    %v1867 = vand.u32 %v323, 4294901760
    %1868 = vmatmul.mubr.f32.gmra.mrb[0].mxu0 %v1867
    %v1869 = vpop.f32.mrb[0].mxu0
    %v1870 = vadd.f32 %v1551, %v1869
    %v1871 = vpop.f32.mrb[0].mxu0
    %1872 = vmatprep.mubr.f32.mxu0 0.0
    %v1873 = vand.u32 %v326, 4294901760
    %1874 = vmatmul.mubr.f32.gmra.mrb[0].mxu0 %v1873
    %v1875 = vpop.f32.mrb[0].mxu0
    %v1876 = vadd.f32 %v1559, %v1875
    %v1877 = vpop.f32.mrb[0].mxu0
    %1878 = vmatprep.mubr.f32.mxu0 0.0
    %v1879 = vand.u32 %v329, 4294901760
    %1880 = vmatmul.mubr.f32.gmra.mrb[0].mxu0 %v1879
    %v1881 = vpop.f32.mrb[0].mxu0
    %v1882 = vadd.f32 %v1567, %v1881
    %v1883 = vpop.f32.mrb[0].mxu0
    %1884 = vmatprep.mubr.f32.mxu0 0.0
    %v1885 = vand.u32 %v332, 4294901760
    %1886 = vmatmul.mubr.f32.gmra.mrb[0].mxu0 %v1885
    %v1887 = vpop.f32.mrb[0].mxu0
    %v1888 = vadd.f32 %v1575, %v1887
    %v1889 = vpop.f32.mrb[0].mxu0
    %1890 = vmatprep.mubr.f32.mxu0 0.0
    %v1891 = vand.u32 %v335, 4294901760
    %1892 = vmatmul.mubr.f32.gmra.mrb[0].mxu0 %v1891
    %v1893 = vpop.f32.mrb[0].mxu0
    %v1894 = vadd.f32 %v1583, %v1893
    %v1895 = vpop.f32.mrb[0].mxu0
    %1896 = vmatprep.mubr.f32.mxu0 0.0
    %v1897 = vand.u32 %v338, 4294901760
    %1898 = vmatmul.mubr.f32.gmra.mrb[0].mxu0 %v1897
    %v1899 = vpop.f32.mrb[0].mxu0
    %v1900 = vadd.f32 %v1591, %v1899
    %v1901 = vpop.f32.mrb[0].mxu0
    %1902 = vmatprep.mubr.f32.mxu0 0.0
    %v1903 = vand.u32 %v341, 4294901760
    %1904 = vmatmul.mubr.f32.gmra.mrb[0].mxu0 %v1903
    %v1905 = vpop.f32.mrb[0].mxu0
    %v1906 = vadd.f32 %v1599, %v1905
    %v1907 = vpop.f32.mrb[0].mxu0
    %1908 = vmatprep.mubr.f32.mxu0 0.0
    %v1909 = vand.u32 %v344, 4294901760
    %1910 = vmatmul.mubr.f32.gmra.mrb[0].mxu0 %v1909
    %v1911 = vpop.f32.mrb[0].mxu0
    %v1912 = vadd.f32 %v1607, %v1911
    %v1913 = vpop.f32.mrb[0].mxu0
    %1914 = vmatprep.mubr.f32.mxu0 0.0
    %v1915 = vand.u32 %v347, 4294901760
    %1916 = vmatmul.mubr.f32.gmra.mrb[0].mxu0 %v1915
    %v1917 = vpop.f32.mrb[0].mxu0
    %v1918 = vadd.f32 %v1615, %v1917
    %v1919 = vpop.f32.mrb[0].mxu0
    %1920 = vmatprep.mubr.f32.mxu0 0.0
    %v1921 = vand.u32 %v350, 4294901760
    %1922 = vmatmul.mubr.f32.gmra.mrb[0].mxu0 %v1921
    %v1923 = vpop.f32.mrb[0].mxu0
    %v1924 = vadd.f32 %v1623, %v1923
    %v1925 = vpop.f32.mrb[0].mxu0
    %1926 = vmatprep.mubr.f32.mxu0 0.0
    %v1927 = vand.u32 %v353, 4294901760
    %1928 = vmatmul.mubr.f32.gmra.mrb[0].mxu0 %v1927
    %v1929 = vpop.f32.mrb[0].mxu0
    %v1930 = vadd.f32 %v1631, %v1929
    %v1931 = vpop.f32.mrb[0].mxu0
    %1932 = vmatprep.mubr.f32.mxu0 0.0
    %v1933 = vand.u32 %v356, 4294901760
    %1934 = vmatmul.mubr.f32.gmra.mrb[0].mxu0 %v1933
    %v1935 = vpop.f32.mrb[0].mxu0
    %v1936 = vadd.f32 %v1639, %v1935
    %v1937 = vpop.f32.mrb[0].mxu0
    %1938 = vmatprep.mubr.f32.mxu0 0.0
    %v1939 = vand.u32 %v359, 4294901760
    %1940 = vmatmul.mubr.f32.gmra.mrb[0].mxu0 %v1939
    %v1941 = vpop.f32.mrb[0].mxu0
    %v1942 = vadd.f32 %v1647, %v1941
    %v1943 = vpop.f32.mrb[0].mxu0
    %1944 = vmatprep.mubr.f32.mxu0 0.0
    %v1945 = vand.u32 %v362, 4294901760
    %1946 = vmatmul.mubr.f32.gmra.mrb[0].mxu0 %v1945
    %v1947 = vpop.f32.mrb[0].mxu0
    %v1948 = vadd.f32 %v1655, %v1947
    %v1949 = vpop.f32.mrb[0].mxu0
    %1950 = vmatprep.mubr.f32.mxu0 0.0
    %v1951 = vand.u32 %v365, 4294901760
    %1952 = vmatmul.mubr.f32.gmra.mrb[0].mxu0 %v1951
    %v1953 = vpop.f32.mrb[0].mxu0
    %v1954 = vadd.f32 %v1663, %v1953
    %v1955 = vpop.f32.mrb[0].mxu0
    %1956 = vmatprep.mubr.f32.mxu0 0.0
    %v1957 = vand.u32 %v368, 4294901760
    %1958 = vmatmul.mubr.f32.gmra.mrb[0].mxu0 %v1957
    %v1959 = vpop.f32.mrb[0].mxu0
    %v1960 = vadd.f32 %v1671, %v1959
    %v1961 = vpop.f32.mrb[0].mxu0
    %1962 = vmatprep.mubr.f32.mxu0 0.0
    %v1963 = vand.u32 %v371, 4294901760
    %1964 = vmatmul.mubr.f32.gmra.mrb[0].mxu0 %v1963
    %v1965 = vpop.f32.mrb[0].mxu0
    %v1966 = vadd.f32 %v1679, %v1965
    %v1967 = vpop.f32.mrb[0].mxu0
    %1968 = vmatprep.mubr.f32.mxu0 0.0
    %v1969 = vand.u32 %v374, 4294901760
    %1970 = vmatmul.mubr.f32.gmra.mrb[0].mxu0 %v1969
    %v1971 = vpop.f32.mrb[0].mxu0
    %v1972 = vadd.f32 %v1687, %v1971
    %v1973 = vpop.f32.mrb[0].mxu0
    %1974 = vmatprep.mubr.f32.mxu0 0.0
    %v1975 = vand.u32 %v377, 4294901760
    %1976 = vmatmul.mubr.f32.gmra.mrb[0].mxu0 %v1975
    %v1977 = vpop.f32.mrb[0].mxu0
    %v1978 = vadd.f32 %v1695, %v1977
    %v1979 = vpop.f32.mrb[0].mxu0
    %1980 = vmatprep.mubr.f32.mxu0 0.0
    %v1981 = vand.u32 %v380, 4294901760
    %1982 = vmatmul.mubr.f32.gmra.mrb[0].mxu0 %v1981
    %v1983 = vpop.f32.mrb[0].mxu0
    %v1984 = vadd.f32 %v1703, %v1983
    %v1985 = vpop.f32.mrb[0].mxu0
    %1986 = vdwg.mxu0
    %1987 = vmatprep.subr.mxu0 0.0
    %v1988 = vand.u32 %v277, 4294901760
    %1989 = vmatpush1.msra.mxu0 %v1988
    %1990 = vmatprep.subr.mxu0 0.0
    %v1991 = vand.u32 %v278, 4294901760
    %1992 = vmatpush1.msra.mxu0 %v1991
    %1993 = vmatprep.subr.mxu0 0.0
    %v1994 = vand.u32 %v279, 4294901760
    %1995 = vmatpush1.msra.mxu0 %v1994
    %1996 = vmatprep.subr.mxu0 0.0
    %v1997 = vand.u32 %v280, 4294901760
    %1998 = vmatpush1.msra.mxu0 %v1997
    %1999 = vmatprep.subr.mxu0 0.0
    %v2000 = vand.u32 %v281, 4294901760
    %2001 = vmatpush1.msra.mxu0 %v2000
    %2002 = vmatprep.subr.mxu0 0.0
    %v2003 = vand.u32 %v282, 4294901760
    %2004 = vmatpush1.msra.mxu0 %v2003
    %2005 = vmatprep.subr.mxu0 0.0
    %v2006 = vand.u32 %v283, 4294901760
    %2007 = vmatpush1.msra.mxu0 %v2006
    %2008 = vmatprep.subr.mxu0 0.0
    %v2009 = vand.u32 %v284, 4294901760
    %2010 = vmatpush1.msra.mxu0 %v2009
    %2011 = vmatprep.subr.mxu0 0.0
    %2012 = vmatpush1.msra.mxu0 0.0
    %2013 = vmatprep.subr.mxu0 0.0
    %2014 = vmatpush1.msra.mxu0 0.0
    %2015 = vmatprep.subr.mxu0 0.0
    %2016 = vmatpush1.msra.mxu0 0.0
    %2017 = vmatprep.subr.mxu0 0.0
    %2018 = vmatpush1.msra.mxu0 0.0
    %2019 = vmatprep.subr.mxu0 0.0
    %2020 = vmatpush1.msra.mxu0 0.0
    %2021 = vmatprep.subr.mxu0 0.0
    %2022 = vmatpush1.msra.mxu0 0.0
    %2023 = vmatprep.subr.mxu0 0.0
    %2024 = vmatpush1.msra.mxu0 0.0
    %2025 = vmatprep.subr.mxu0 0.0
    %2026 = vmatpush1.msra.mxu0 0.0
    %2027 = vmatprep.subr.mxu0 0.0
    %2028 = vmatpush1.msra.mxu0 0.0
    %2029 = vmatprep.subr.mxu0 0.0
    %2030 = vmatpush1.msra.mxu0 0.0
    %2031 = vmatprep.subr.mxu0 0.0
    %2032 = vmatpush1.msra.mxu0 0.0
    %2033 = vmatprep.subr.mxu0 0.0
    %2034 = vmatpush1.msra.mxu0 0.0
    %2035 = vmatprep.subr.mxu0 0.0
    %2036 = vmatpush1.msra.mxu0 0.0
    %2037 = vmatprep.subr.mxu0 0.0
    %2038 = vmatpush1.msra.mxu0 0.0
    %2039 = vmatprep.subr.mxu0 0.0
    %2040 = vmatpush1.msra.mxu0 0.0
    %2041 = vmatprep.subr.mxu0 0.0
    %2042 = vmatpush1.msra.mxu0 0.0
    %2043 = vmatprep.subr.mxu0 0.0
    %2044 = vmatpush1.msra.mxu0 0.0
    %2045 = vmatprep.subr.mxu0 0.0
    %2046 = vmatpush1.msra.mxu0 0.0
    %2047 = vmatprep.subr.mxu0 0.0
    %2048 = vmatpush1.msra.mxu0 0.0
    %2049 = vmatprep.subr.mxu0 0.0
    %2050 = vmatpush1.msra.mxu0 0.0
    %2051 = vmatprep.subr.mxu0 0.0
    %2052 = vmatpush1.msra.mxu0 0.0
    %2053 = vmatprep.subr.mxu0 0.0
    %2054 = vmatpush1.msra.mxu0 0.0
    %2055 = vmatprep.subr.mxu0 0.0
    %2056 = vmatpush1.msra.mxu0 0.0
    %2057 = vmatprep.subr.mxu0 0.0
    %2058 = vmatpush1.msra.mxu0 0.0
    %2059 = vmatprep.mubr.f32.mxu0 0.0
    %v2060 = vand.u32 %v287, 4294901760
    %2061 = vmatmul.mubr.f32.gmra.mrb[0].mxu0 %v2060
    %v2062 = vpop.f32.mrb[0].mxu0
    %v2063 = vadd.f32 %v1798, %v2062
    %v2064 = vpop.f32.mrb[0].mxu0
    %2065 = vmatprep.mubr.f32.mxu0 0.0
    %v2066 = vand.u32 %v290, 4294901760
    %2067 = vmatmul.mubr.f32.gmra.mrb[0].mxu0 %v2066
    %v2068 = vpop.f32.mrb[0].mxu0
    %v2069 = vadd.f32 %v1804, %v2068
    %v2070 = vpop.f32.mrb[0].mxu0
    %2071 = vmatprep.mubr.f32.mxu0 0.0
    %v2072 = vand.u32 %v293, 4294901760
    %2073 = vmatmul.mubr.f32.gmra.mrb[0].mxu0 %v2072
    %v2074 = vpop.f32.mrb[0].mxu0
    %v2075 = vadd.f32 %v1810, %v2074
    %v2076 = vpop.f32.mrb[0].mxu0
    %2077 = vmatprep.mubr.f32.mxu0 0.0
    %v2078 = vand.u32 %v296, 4294901760
    %2079 = vmatmul.mubr.f32.gmra.mrb[0].mxu0 %v2078
    %v2080 = vpop.f32.mrb[0].mxu0
    %v2081 = vadd.f32 %v1816, %v2080
    %v2082 = vpop.f32.mrb[0].mxu0
    %2083 = vmatprep.mubr.f32.mxu0 0.0
    %v2084 = vand.u32 %v299, 4294901760
    %2085 = vmatmul.mubr.f32.gmra.mrb[0].mxu0 %v2084
    %v2086 = vpop.f32.mrb[0].mxu0
    %v2087 = vadd.f32 %v1822, %v2086
    %v2088 = vpop.f32.mrb[0].mxu0
    %2089 = vmatprep.mubr.f32.mxu0 0.0
    %v2090 = vand.u32 %v302, 4294901760
    %2091 = vmatmul.mubr.f32.gmra.mrb[0].mxu0 %v2090
    %v2092 = vpop.f32.mrb[0].mxu0
    %v2093 = vadd.f32 %v1828, %v2092
    %v2094 = vpop.f32.mrb[0].mxu0
    %2095 = vmatprep.mubr.f32.mxu0 0.0
    %v2096 = vand.u32 %v305, 4294901760
    %2097 = vmatmul.mubr.f32.gmra.mrb[0].mxu0 %v2096
    %v2098 = vpop.f32.mrb[0].mxu0
    %v2099 = vadd.f32 %v1834, %v2098
    %v2100 = vpop.f32.mrb[0].mxu0
    %2101 = vmatprep.mubr.f32.mxu0 0.0
    %v2102 = vand.u32 %v308, 4294901760
    %2103 = vmatmul.mubr.f32.gmra.mrb[0].mxu0 %v2102
    %v2104 = vpop.f32.mrb[0].mxu0
    %v2105 = vadd.f32 %v1840, %v2104
    %v2106 = vpop.f32.mrb[0].mxu0
    %2107 = vmatprep.mubr.f32.mxu0 0.0
    %v2108 = vand.u32 %v311, 4294901760
    %2109 = vmatmul.mubr.f32.gmra.mrb[0].mxu0 %v2108
    %v2110 = vpop.f32.mrb[0].mxu0
    %v2111 = vadd.f32 %v1846, %v2110
    %v2112 = vpop.f32.mrb[0].mxu0
    %2113 = vmatprep.mubr.f32.mxu0 0.0
    %v2114 = vand.u32 %v314, 4294901760
    %2115 = vmatmul.mubr.f32.gmra.mrb[0].mxu0 %v2114
    %v2116 = vpop.f32.mrb[0].mxu0
    %v2117 = vadd.f32 %v1852, %v2116
    %v2118 = vpop.f32.mrb[0].mxu0
    %2119 = vmatprep.mubr.f32.mxu0 0.0
    %v2120 = vand.u32 %v317, 4294901760
    %2121 = vmatmul.mubr.f32.gmra.mrb[0].mxu0 %v2120
    %v2122 = vpop.f32.mrb[0].mxu0
    %v2123 = vadd.f32 %v1858, %v2122
    %v2124 = vpop.f32.mrb[0].mxu0
    %2125 = vmatprep.mubr.f32.mxu0 0.0
    %v2126 = vand.u32 %v320, 4294901760
    %2127 = vmatmul.mubr.f32.gmra.mrb[0].mxu0 %v2126
    %v2128 = vpop.f32.mrb[0].mxu0
    %v2129 = vadd.f32 %v1864, %v2128
    %v2130 = vpop.f32.mrb[0].mxu0
    %2131 = vmatprep.mubr.f32.mxu0 0.0
    %v2132 = vand.u32 %v323, 4294901760
    %2133 = vmatmul.mubr.f32.gmra.mrb[0].mxu0 %v2132
    %v2134 = vpop.f32.mrb[0].mxu0
    %v2135 = vadd.f32 %v1870, %v2134
    %v2136 = vpop.f32.mrb[0].mxu0
    %2137 = vmatprep.mubr.f32.mxu0 0.0
    %v2138 = vand.u32 %v326, 4294901760
    %2139 = vmatmul.mubr.f32.gmra.mrb[0].mxu0 %v2138
    %v2140 = vpop.f32.mrb[0].mxu0
    %v2141 = vadd.f32 %v1876, %v2140
    %v2142 = vpop.f32.mrb[0].mxu0
    %2143 = vmatprep.mubr.f32.mxu0 0.0
    %v2144 = vand.u32 %v329, 4294901760
    %2145 = vmatmul.mubr.f32.gmra.mrb[0].mxu0 %v2144
    %v2146 = vpop.f32.mrb[0].mxu0
    %v2147 = vadd.f32 %v1882, %v2146
    %v2148 = vpop.f32.mrb[0].mxu0
    %2149 = vmatprep.mubr.f32.mxu0 0.0
    %v2150 = vand.u32 %v332, 4294901760
    %2151 = vmatmul.mubr.f32.gmra.mrb[0].mxu0 %v2150
    %v2152 = vpop.f32.mrb[0].mxu0
    %v2153 = vadd.f32 %v1888, %v2152
    %v2154 = vpop.f32.mrb[0].mxu0
    %2155 = vmatprep.mubr.f32.mxu0 0.0
    %v2156 = vand.u32 %v335, 4294901760
    %2157 = vmatmul.mubr.f32.gmra.mrb[0].mxu0 %v2156
    %v2158 = vpop.f32.mrb[0].mxu0
    %v2159 = vadd.f32 %v1894, %v2158
    %v2160 = vpop.f32.mrb[0].mxu0
    %2161 = vmatprep.mubr.f32.mxu0 0.0
    %v2162 = vand.u32 %v338, 4294901760
    %2163 = vmatmul.mubr.f32.gmra.mrb[0].mxu0 %v2162
    %v2164 = vpop.f32.mrb[0].mxu0
    %v2165 = vadd.f32 %v1900, %v2164
    %v2166 = vpop.f32.mrb[0].mxu0
    %2167 = vmatprep.mubr.f32.mxu0 0.0
    %v2168 = vand.u32 %v341, 4294901760
    %2169 = vmatmul.mubr.f32.gmra.mrb[0].mxu0 %v2168
    %v2170 = vpop.f32.mrb[0].mxu0
    %v2171 = vadd.f32 %v1906, %v2170
    %v2172 = vpop.f32.mrb[0].mxu0
    %2173 = vmatprep.mubr.f32.mxu0 0.0
    %v2174 = vand.u32 %v344, 4294901760
    %2175 = vmatmul.mubr.f32.gmra.mrb[0].mxu0 %v2174
    %v2176 = vpop.f32.mrb[0].mxu0
    %v2177 = vadd.f32 %v1912, %v2176
    %v2178 = vpop.f32.mrb[0].mxu0
    %2179 = vmatprep.mubr.f32.mxu0 0.0
    %v2180 = vand.u32 %v347, 4294901760
    %2181 = vmatmul.mubr.f32.gmra.mrb[0].mxu0 %v2180
    %v2182 = vpop.f32.mrb[0].mxu0
    %v2183 = vadd.f32 %v1918, %v2182
    %v2184 = vpop.f32.mrb[0].mxu0
    %2185 = vmatprep.mubr.f32.mxu0 0.0
    %v2186 = vand.u32 %v350, 4294901760
    %2187 = vmatmul.mubr.f32.gmra.mrb[0].mxu0 %v2186
    %v2188 = vpop.f32.mrb[0].mxu0
    %v2189 = vadd.f32 %v1924, %v2188
    %v2190 = vpop.f32.mrb[0].mxu0
    %2191 = vmatprep.mubr.f32.mxu0 0.0
    %v2192 = vand.u32 %v353, 4294901760
    %2193 = vmatmul.mubr.f32.gmra.mrb[0].mxu0 %v2192
    %v2194 = vpop.f32.mrb[0].mxu0
    %v2195 = vadd.f32 %v1930, %v2194
    %v2196 = vpop.f32.mrb[0].mxu0
    %2197 = vmatprep.mubr.f32.mxu0 0.0
    %v2198 = vand.u32 %v356, 4294901760
    %2199 = vmatmul.mubr.f32.gmra.mrb[0].mxu0 %v2198
    %v2200 = vpop.f32.mrb[0].mxu0
    %v2201 = vadd.f32 %v1936, %v2200
    %v2202 = vpop.f32.mrb[0].mxu0
    %2203 = vmatprep.mubr.f32.mxu0 0.0
    %v2204 = vand.u32 %v359, 4294901760
    %2205 = vmatmul.mubr.f32.gmra.mrb[0].mxu0 %v2204
    %v2206 = vpop.f32.mrb[0].mxu0
    %v2207 = vadd.f32 %v1942, %v2206
    %v2208 = vpop.f32.mrb[0].mxu0
    %2209 = vmatprep.mubr.f32.mxu0 0.0
    %v2210 = vand.u32 %v362, 4294901760
    %2211 = vmatmul.mubr.f32.gmra.mrb[0].mxu0 %v2210
    %v2212 = vpop.f32.mrb[0].mxu0
    %v2213 = vadd.f32 %v1948, %v2212
    %v2214 = vpop.f32.mrb[0].mxu0
    %2215 = vmatprep.mubr.f32.mxu0 0.0
    %v2216 = vand.u32 %v365, 4294901760
    %2217 = vmatmul.mubr.f32.gmra.mrb[0].mxu0 %v2216
    %v2218 = vpop.f32.mrb[0].mxu0
    %v2219 = vadd.f32 %v1954, %v2218
    %v2220 = vpop.f32.mrb[0].mxu0
    %2221 = vmatprep.mubr.f32.mxu0 0.0
    %v2222 = vand.u32 %v368, 4294901760
    %2223 = vmatmul.mubr.f32.gmra.mrb[0].mxu0 %v2222
    %v2224 = vpop.f32.mrb[0].mxu0
    %v2225 = vadd.f32 %v1960, %v2224
    %v2226 = vpop.f32.mrb[0].mxu0
    %2227 = vmatprep.mubr.f32.mxu0 0.0
    %v2228 = vand.u32 %v371, 4294901760
    %2229 = vmatmul.mubr.f32.gmra.mrb[0].mxu0 %v2228
    %v2230 = vpop.f32.mrb[0].mxu0
    %v2231 = vadd.f32 %v1966, %v2230
    %v2232 = vpop.f32.mrb[0].mxu0
    %2233 = vmatprep.mubr.f32.mxu0 0.0
    %v2234 = vand.u32 %v374, 4294901760
    %2235 = vmatmul.mubr.f32.gmra.mrb[0].mxu0 %v2234
    %v2236 = vpop.f32.mrb[0].mxu0
    %v2237 = vadd.f32 %v1972, %v2236
    %v2238 = vpop.f32.mrb[0].mxu0
    %2239 = vmatprep.mubr.f32.mxu0 0.0
    %v2240 = vand.u32 %v377, 4294901760
    %2241 = vmatmul.mubr.f32.gmra.mrb[0].mxu0 %v2240
    %v2242 = vpop.f32.mrb[0].mxu0
    %v2243 = vadd.f32 %v1978, %v2242
    %v2244 = vpop.f32.mrb[0].mxu0
    %2245 = vmatprep.mubr.f32.mxu0 0.0
    %v2246 = vand.u32 %v380, 4294901760
    %2247 = vmatmul.mubr.f32.gmra.mrb[0].mxu0 %v2246
    %v2248 = vpop.f32.mrb[0].mxu0
    %v2249 = vadd.f32 %v1984, %v2248
    %v2250 = vpop.f32.mrb[0].mxu0
    %2251 = vdwg.mxu0
    %v2252 = vadd.f32 %v245, %v2063
    %v2253 = vadd.f32 %v246, %v2069
    %v2254 = vadd.f32 %v247, %v2075
    %v2255 = vadd.f32 %v248, %v2081
    %v2256 = vadd.f32 %v249, %v2087
    %v2257 = vadd.f32 %v250, %v2093
    %v2258 = vadd.f32 %v251, %v2099
    %v2259 = vadd.f32 %v252, %v2105
    %v2260 = vadd.f32 %v253, %v2111
    %v2261 = vadd.f32 %v254, %v2117
    %v2262 = vadd.f32 %v255, %v2123
    %v2263 = vadd.f32 %v256, %v2129
    %v2264 = vadd.f32 %v257, %v2135
    %v2265 = vadd.f32 %v258, %v2141
    %v2266 = vadd.f32 %v259, %v2147
    %v2267 = vadd.f32 %v260, %v2153
    %v2268 = vadd.f32 %v261, %v2159
    %v2269 = vadd.f32 %v262, %v2165
    %v2270 = vadd.f32 %v263, %v2171
    %v2271 = vadd.f32 %v264, %v2177
    %v2272 = vadd.f32 %v265, %v2183
    %v2273 = vadd.f32 %v266, %v2189
    %v2274 = vadd.f32 %v267, %v2195
    %v2275 = vadd.f32 %v268, %v2201
    %v2276 = vadd.f32 %v269, %v2207
    %v2277 = vadd.f32 %v270, %v2213
    %v2278 = vadd.f32 %v271, %v2219
    %v2279 = vadd.f32 %v272, %v2225
    %v2280 = vadd.f32 %v273, %v2231
    %v2281 = vadd.f32 %v274, %v2237
    %v2282 = vadd.f32 %v275, %v2243
    %v2283 = vadd.f32 %v276, %v2249
    %2284 = vst [vmem:[#allocation2] sm:$0xff] %v2252
    %2285 = vst [vmem:[#allocation2 + $0x8] sm:$0xff] %v2253
    %2286 = vst [vmem:[#allocation2 + $0x10] sm:$0xff] %v2254
    %2287 = vst [vmem:[#allocation2 + $0x18] sm:$0xff] %v2255
    %2288 = vst [vmem:[#allocation2 + $0x20] sm:$0xff] %v2256
    %2289 = vst [vmem:[#allocation2 + $0x28] sm:$0xff] %v2257
    %2290 = vst [vmem:[#allocation2 + $0x30] sm:$0xff] %v2258
    %2291 = vst [vmem:[#allocation2 + $0x38] sm:$0xff] %v2259
    %2292 = vst [vmem:[#allocation2 + $0x40] sm:$0xff] %v2260
    %2293 = vst [vmem:[#allocation2 + $0x48] sm:$0xff] %v2261
    %2294 = vst [vmem:[#allocation2 + $0x50] sm:$0xff] %v2262
    %2295 = vst [vmem:[#allocation2 + $0x58] sm:$0xff] %v2263
    %2296 = vst [vmem:[#allocation2 + $0x60] sm:$0xff] %v2264
    %2297 = vst [vmem:[#allocation2 + $0x68] sm:$0xff] %v2265
    %2298 = vst [vmem:[#allocation2 + $0x70] sm:$0xff] %v2266
    %2299 = vst [vmem:[#allocation2 + $0x78] sm:$0xff] %v2267
    %2300 = vst [vmem:[#allocation2 + $0x80] sm:$0xff] %v2268
    %2301 = vst [vmem:[#allocation2 + $0x88] sm:$0xff] %v2269
    %2302 = vst [vmem:[#allocation2 + $0x90] sm:$0xff] %v2270
    %2303 = vst [vmem:[#allocation2 + $0x98] sm:$0xff] %v2271
    %2304 = vst [vmem:[#allocation2 + $0xa0] sm:$0xff] %v2272
    %2305 = vst [vmem:[#allocation2 + $0xa8] sm:$0xff] %v2273
    %2306 = vst [vmem:[#allocation2 + $0xb0] sm:$0xff] %v2274
    %2307 = vst [vmem:[#allocation2 + $0xb8] sm:$0xff] %v2275
    %2308 = vst [vmem:[#allocation2 + $0xc0] sm:$0xff] %v2276
    %2309 = vst [vmem:[#allocation2 + $0xc8] sm:$0xff] %v2277
    %2310 = vst [vmem:[#allocation2 + $0xd0] sm:$0xff] %v2278
    %2311 = vst [vmem:[#allocation2 + $0xd8] sm:$0xff] %v2279
    %2312 = vst [vmem:[#allocation2 + $0xe0] sm:$0xff] %v2280
    %2313 = vst [vmem:[#allocation2 + $0xe8] sm:$0xff] %v2281
    %2314 = vst [vmem:[#allocation2 + $0xf0] sm:$0xff] %v2282
    %2315 = vst [vmem:[#allocation2 + $0xf8] sm:$0xff] %v2283
    // Predicated region
    $region14: #{tpu_custom_call.1} parent=1 // pred_check
      %p2316 = pneg %p12
    $region15: #{tpu_custom_call.1} parent=1 // pred_check_branch
      %2318 = sbr.rel (%p2316) target = $region17
    $region16: #{tpu_custom_call.1} parent=1 // pred_region
      %v2319 = vld [vmem:[#allocation2] sm:$0xff]
      %v2320 = vld [vmem:[#allocation2 + $0x8] sm:$0xff]
      %v2321 = vld [vmem:[#allocation2 + $0x10] sm:$0xff]
      %v2322 = vld [vmem:[#allocation2 + $0x18] sm:$0xff]
      %v2323 = vld [vmem:[#allocation2 + $0x20] sm:$0xff]
      %v2324 = vld [vmem:[#allocation2 + $0x28] sm:$0xff]
      %v2325 = vld [vmem:[#allocation2 + $0x30] sm:$0xff]
      %v2326 = vld [vmem:[#allocation2 + $0x38] sm:$0xff]
      %v2327 = vld [vmem:[#allocation2 + $0x40] sm:$0xff]
      %v2328 = vld [vmem:[#allocation2 + $0x48] sm:$0xff]
      %v2329 = vld [vmem:[#allocation2 + $0x50] sm:$0xff]
      %v2330 = vld [vmem:[#allocation2 + $0x58] sm:$0xff]
      %v2331 = vld [vmem:[#allocation2 + $0x60] sm:$0xff]
      %v2332 = vld [vmem:[#allocation2 + $0x68] sm:$0xff]
      %v2333 = vld [vmem:[#allocation2 + $0x70] sm:$0xff]
      %v2334 = vld [vmem:[#allocation2 + $0x78] sm:$0xff]
      %v2335 = vld [vmem:[#allocation2 + $0x80] sm:$0xff]
      %v2336 = vld [vmem:[#allocation2 + $0x88] sm:$0xff]
      %v2337 = vld [vmem:[#allocation2 + $0x90] sm:$0xff]
      %v2338 = vld [vmem:[#allocation2 + $0x98] sm:$0xff]
      %v2339 = vld [vmem:[#allocation2 + $0xa0] sm:$0xff]
      %v2340 = vld [vmem:[#allocation2 + $0xa8] sm:$0xff]
      %v2341 = vld [vmem:[#allocation2 + $0xb0] sm:$0xff]
      %v2342 = vld [vmem:[#allocation2 + $0xb8] sm:$0xff]
      %v2343 = vld [vmem:[#allocation2 + $0xc0] sm:$0xff]
      %v2344 = vld [vmem:[#allocation2 + $0xc8] sm:$0xff]
      %v2345 = vld [vmem:[#allocation2 + $0xd0] sm:$0xff]
      %v2346 = vld [vmem:[#allocation2 + $0xd8] sm:$0xff]
      %v2347 = vld [vmem:[#allocation2 + $0xe0] sm:$0xff]
      %v2348 = vld [vmem:[#allocation2 + $0xe8] sm:$0xff]
      %v2349 = vld [vmem:[#allocation2 + $0xf0] sm:$0xff]
      %v2350 = vld [vmem:[#allocation2 + $0xf8] sm:$0xff]
      %v2351 = vmul.f32 %v2319, 11.313708
      %v2352 = vmul.f32 %v2320, 11.313708
      %v2353 = vmul.f32 %v2321, 11.313708
      %v2354 = vmul.f32 %v2322, 11.313708
      %v2355 = vmul.f32 %v2323, 11.313708
      %v2356 = vmul.f32 %v2324, 11.313708
      %v2357 = vmul.f32 %v2325, 11.313708
      %v2358 = vmul.f32 %v2326, 11.313708
      %v2359 = vmul.f32 %v2327, 11.313708
      %v2360 = vmul.f32 %v2328, 11.313708
      %v2361 = vmul.f32 %v2329, 11.313708
      %v2362 = vmul.f32 %v2330, 11.313708
      %v2363 = vmul.f32 %v2331, 11.313708
      %v2364 = vmul.f32 %v2332, 11.313708
      %v2365 = vmul.f32 %v2333, 11.313708
      %v2366 = vmul.f32 %v2334, 11.313708
      %v2367 = vmul.f32 %v2335, 11.313708
      %v2368 = vmul.f32 %v2336, 11.313708
      %v2369 = vmul.f32 %v2337, 11.313708
      %v2370 = vmul.f32 %v2338, 11.313708
      %v2371 = vmul.f32 %v2339, 11.313708
      %v2372 = vmul.f32 %v2340, 11.313708
      %v2373 = vmul.f32 %v2341, 11.313708
      %v2374 = vmul.f32 %v2342, 11.313708
      %v2375 = vmul.f32 %v2343, 11.313708
      %v2376 = vmul.f32 %v2344, 11.313708
      %v2377 = vmul.f32 %v2345, 11.313708
      %v2378 = vmul.f32 %v2346, 11.313708
      %v2379 = vmul.f32 %v2347, 11.313708
      %v2380 = vmul.f32 %v2348, 11.313708
      %v2381 = vmul.f32 %v2349, 11.313708
      %v2382 = vmul.f32 %v2350, 11.313708
      %2383 = vst [vmem:[#allocation3] sm:$0xff] %v2351
      %2384 = vst [vmem:[#allocation3 + $0x8] sm:$0xff] %v2352
      %2385 = vst [vmem:[#allocation3 + $0x10] sm:$0xff] %v2353
      %2386 = vst [vmem:[#allocation3 + $0x18] sm:$0xff] %v2354
      %2387 = vst [vmem:[#allocation3 + $0x20] sm:$0xff] %v2355
      %2388 = vst [vmem:[#allocation3 + $0x28] sm:$0xff] %v2356
      %2389 = vst [vmem:[#allocation3 + $0x30] sm:$0xff] %v2357
      %2390 = vst [vmem:[#allocation3 + $0x38] sm:$0xff] %v2358
      %2391 = vst [vmem:[#allocation3 + $0x40] sm:$0xff] %v2359
      %2392 = vst [vmem:[#allocation3 + $0x48] sm:$0xff] %v2360
      %2393 = vst [vmem:[#allocation3 + $0x50] sm:$0xff] %v2361
      %2394 = vst [vmem:[#allocation3 + $0x58] sm:$0xff] %v2362
      %2395 = vst [vmem:[#allocation3 + $0x60] sm:$0xff] %v2363
      %2396 = vst [vmem:[#allocation3 + $0x68] sm:$0xff] %v2364
      %2397 = vst [vmem:[#allocation3 + $0x70] sm:$0xff] %v2365
      %2398 = vst [vmem:[#allocation3 + $0x78] sm:$0xff] %v2366
      %2399 = vst [vmem:[#allocation3 + $0x80] sm:$0xff] %v2367
      %2400 = vst [vmem:[#allocation3 + $0x88] sm:$0xff] %v2368
      %2401 = vst [vmem:[#allocation3 + $0x90] sm:$0xff] %v2369
      %2402 = vst [vmem:[#allocation3 + $0x98] sm:$0xff] %v2370
      %2403 = vst [vmem:[#allocation3 + $0xa0] sm:$0xff] %v2371
      %2404 = vst [vmem:[#allocation3 + $0xa8] sm:$0xff] %v2372
      %2405 = vst [vmem:[#allocation3 + $0xb0] sm:$0xff] %v2373
      %2406 = vst [vmem:[#allocation3 + $0xb8] sm:$0xff] %v2374
      %2407 = vst [vmem:[#allocation3 + $0xc0] sm:$0xff] %v2375
      %2408 = vst [vmem:[#allocation3 + $0xc8] sm:$0xff] %v2376
      %2409 = vst [vmem:[#allocation3 + $0xd0] sm:$0xff] %v2377
      %2410 = vst [vmem:[#allocation3 + $0xd8] sm:$0xff] %v2378
      %2411 = vst [vmem:[#allocation3 + $0xe0] sm:$0xff] %v2379
      %2412 = vst [vmem:[#allocation3 + $0xe8] sm:$0xff] %v2380
      %2413 = vst [vmem:[#allocation3 + $0xf0] sm:$0xff] %v2381
      %2414 = vst [vmem:[#allocation3 + $0xf8] sm:$0xff] %v2382
    $region17: #{tpu_custom_call.1} parent=1 // pred_fallthru
      _
    // Predicated region
    $region18: #{tpu_custom_call.1} parent=1 // pred_check
      _
    $region19: #{tpu_custom_call.1} parent=1 // pred_check_branch
      %2416 = sbr.rel (0) target = $region21
    $region20: #{tpu_custom_call.1} parent=1 // pred_region
      %s2418 = ssub.s32 4096, 4096
      %2419 = vsyncadd [#allocation4], %s2418
      %s2420 = sshll.u32 [#allocation3], 4
      %s2421 = int_to_ptr.vmem [resolvable:$true] %s2420
      %2426 = dma.vmem_to_hbm [thread:$0]  %s2421, 4096, %s2, [#allocation4], 128, 128, 8
    $region21: #{tpu_custom_call.1} parent=1 // pred_fallthru
      _
    // Predicated region
    $region22: #{tpu_custom_call.1} parent=1 // pred_check
      _
    $region23: #{tpu_custom_call.1} parent=1 // pred_check_branch
      %2428 = sbr.rel (0) target = $region25
    $region24: #{tpu_custom_call.1} parent=1 // pred_region
      %2429 = dma.done [#allocation4], 4096
    $region25: #{tpu_custom_call.1} parent=1 // pred_fallthru
      _
    %2430 = vsyncpa [#allocation4], 1

</llo_original>
